<compile_context>
chip_gen: v7x
topology: tpu7x:2x2x1
jax: 0.10.0
libtpu: 0.0.40
codegen_flags: <defaults>
</compile_context>

<pallas_src>
from functools import partial

import jax
import jax.numpy as jnp
from jax.experimental import pallas as pl
from jax.experimental.pallas import tpu as pltpu

_GN_EPS = 1e-5   # torch.nn.GroupNorm default


def _cbn_kernel(gb_ref, x_ref, o_ref, scale_ref, shift_ref, *,
                groups_per_block, inv_n, eps):
    """Two-pass GroupNorm + conditional scale/shift for one block.

    Grid: (batch_blocks, group_blocks, pass, T_tiles)

    gb_ref    : (Bb, Cblk, 2)   gb[..., 0] = gamma, gb[..., 1] = beta
    x_ref     : (Bb, Cblk, tT)  feature tile
    o_ref     : (Bb, Cblk, tT)  output tile (written in pass 1 only)
    scale_ref : (Bb, Cblk, 1)   scratch: per-channel sum   -> per-channel scale
    shift_ref : (Bb, Cblk, 1)   scratch: per-channel sumsq -> per-channel shift
    """
    p = pl.program_id(2)
    t = pl.program_id(3)
    cblk = x_ref.shape[1]
    cg = cblk // groups_per_block            # channels per GroupNorm group

    # ---------------- pass 0: accumulate per-channel statistics ------------
    @pl.when(p == 0)
    def _stats():
        @pl.when(t == 0)
        def _zero():
            scale_ref[...] = jnp.zeros_like(scale_ref)
            shift_ref[...] = jnp.zeros_like(shift_ref)

        # Two independent streaming reads from the VMEM ref (vld slots are
        # cheap) rather than holding one large tile value live across both
        # reductions.
        scale_ref[...] += jnp.sum(x_ref[...].astype(jnp.float32),
                                  axis=-1, keepdims=True)
        xv = x_ref[...].astype(jnp.float32)
        shift_ref[...] += jnp.sum(xv * xv, axis=-1, keepdims=True)

    # ---- pass 1, first tile: finalize stats -> per-channel scale/shift ----
    @pl.when(jnp.logical_and(p == 1, t == 0))
    def _finalize():
        s = scale_ref[...]                    # (Bb, Cblk, 1) channel sums
        ss = shift_ref[...]                   # (Bb, Cblk, 1) channel sumsq
        gamma = gb_ref[:, :, 0:1].astype(jnp.float32)
        beta = gb_ref[:, :, 1:2].astype(jnp.float32)
        for g in range(groups_per_block):     # static unroll over tiny slices
            lo, hi = g * cg, (g + 1) * cg
            sum_g = jnp.sum(s[:, lo:hi, :], axis=1, keepdims=True)    # (Bb,1,1)
            sumsq_g = jnp.sum(ss[:, lo:hi, :], axis=1, keepdims=True)
            mean = sum_g * inv_n
            var = jnp.maximum(sumsq_g * inv_n - mean * mean, 0.0)
            inv_std = jax.lax.rsqrt(var + eps)
            sc = gamma[:, lo:hi, :] * inv_std                         # (Bb,cg,1)
            scale_ref[:, lo:hi, :] = sc
            shift_ref[:, lo:hi, :] = beta[:, lo:hi, :] - sc * mean

    # ---------------- pass 1: normalize, one full-block store --------------
    @pl.when(p == 1)
    def _apply():
        o_ref[...] = (x_ref[...].astype(jnp.float32) * scale_ref[...]
                      + shift_ref[...]).astype(o_ref.dtype)


# ------------------------------ tiling helpers ------------------------------

def _pick_block_t(T, cap=2048):
    """Largest T tile that is a multiple of 128, divides T and is <= cap."""
    if T <= cap:
        return T
    best = 0
    for d in range(128, cap + 1, 128):
        if T % d == 0:
            best = d
    # TODO(synk): pad/mask ragged T instead of falling back to a full-T tile.
    return best if best > 0 else T


def _pick_block_b(B, bytes_per_sample, target_bytes=2 << 20):
    """Pack samples per grid step until ~target_bytes are moved per step."""
    bb = int(max(1, min(B, target_bytes // max(bytes_per_sample, 1))))
    while B % bb:
        bb -= 1
    return bb


def _pick_group_blocks(n_batch_blocks, groups, f_dim):
    """Split channel groups onto a parallel grid axis only when the batch axis
    alone cannot keep both TensorCores busy (v7x megacore, B == 1)."""
    if n_batch_blocks >= 2 or groups % 2 != 0:
        return 1
    if (f_dim // 2) % 8 != 0:        # keep the channel tile sublane-aligned
        return 1
    return 2


# --------------------------------- wrapper ----------------------------------

def cbatchnorm1d(x, c, w_gamma, b_gamma, w_beta, b_beta, *, groups=8,
                 eps=_GN_EPS, block_t=None, block_b=None, group_blocks=None):
    """Forward pass of CBatchNorm1d.

    x       : (B, f_dim, T)                  features (f32 or bf16)
    c       : (B, c_dim) or (B, c_dim, 1)    latent conditioning code
    w_gamma : (f_dim, c_dim), b_gamma: (f_dim,)    Conv1d(c_dim, f_dim, 1)
    w_beta  : (f_dim, c_dim), b_beta : (f_dim,)
    returns : (B, f_dim, T) with x's dtype
    """
    if c.ndim == 3:                  # matches the PyTorch `c.unsqueeze(2)` path
        c = c[:, :, 0]
    B, f_dim, T = x.shape
    c_dim = c.shape[1]
    assert c.shape[0] == B
    assert f_dim % groups == 0
    cg = f_dim // groups

    # --- hoisted conditional affine: one MXU matmul for the whole batch -----
    hp = jax.lax.Precision.HIGHEST
    w_cat = jnp.stack([w_gamma, w_beta], axis=0).astype(jnp.float32)   # (2,F,C)
    b_cat = jnp.stack([b_gamma, b_beta], axis=0).astype(jnp.float32)   # (2,F)
    gb = (jnp.einsum('kfc,bc->bfk', w_cat, c.astype(jnp.float32), precision=hp)
          + b_cat.T[None])                                             # (B,F,2)

    # --- block / grid selection ---------------------------------------------
    itemsize = jnp.dtype(x.dtype).itemsize
    tt = block_t if block_t is not None else _pick_block_t(T)
    assert T % tt == 0 and (tt % 128 == 0 or tt == T)
    bb = (block_b if block_b is not None
          else _pick_block_b(B, f_dim * tt * itemsize))
    assert B % bb == 0
    n_b = B // bb
    n_g = (group_blocks if group_blocks is not None
           else _pick_group_blocks(n_b, groups, f_dim))
    assert groups % n_g == 0 and (f_dim // n_g) % 8 == 0
    gpb = groups // n_g              # GroupNorm groups handled per grid block
    cblk = f_dim // n_g              # channels per grid block
    n_t = T // tt

    # --- explicit VMEM budget (double-buffered blocks + scratch) ------------
    x_blk = bb * cblk * tt * itemsize
    o_blk = bb * cblk * tt * itemsize
    gb_blk = bb * cblk * 128 * 4                 # lane-padded small block
    scratch = 2 * bb * cblk * 128 * 4
    est = 2 * (x_blk + o_blk) + 2 * gb_blk + scratch
    vmem_limit = int(min(max(2 * est, 32 << 20), 64 << 20))

    kernel = partial(_cbn_kernel, groups_per_block=gpb,
                     inv_n=1.0 / float(cg * T), eps=float(eps))

    return pl.pallas_call(
        kernel,
        out_shape=jax.ShapeDtypeStruct((B, f_dim, T), x.dtype),
        grid=(n_b, n_g, 2, n_t),
        in_specs=[
            # per-sample gamma/beta pair, resident across the (pass, T) loop
            pl.BlockSpec((bb, cblk, 2), lambda ib, ig, p, t: (ib, ig, 0)),
            # feature tile (streamed twice: stats pass + normalize pass)
            pl.BlockSpec((bb, cblk, tt), lambda ib, ig, p, t: (ib, ig, t)),
        ],
        # Park the output block on tile 0 during the stats pass so nothing is
        # written back to HBM until pass 1 actually produces it.
        out_specs=pl.BlockSpec((bb, cblk, tt),
                               lambda ib, ig, p, t: (ib, ig, t * p)),
        scratch_shapes=[
            pltpu.VMEM((bb, cblk, 1), jnp.float32),   # sum   -> scale
            pltpu.VMEM((bb, cblk, 1), jnp.float32),   # sumsq -> shift
        ],
        compiler_params=pltpu.CompilerParams(
            dimension_semantics=("parallel", "parallel", "arbitrary",
                                 "arbitrary"),
            vmem_limit_bytes=vmem_limit),
    )(gb, x)


# -------------------------------- reference ---------------------------------

def _reference(x, c, w_gamma, b_gamma, w_beta, b_beta, *, groups=8,
               eps=_GN_EPS):
    """Plain-JAX reference reproducing the PyTorch forward."""
    if c.ndim == 3:
        c = c[:, :, 0]
    hp = jax.lax.Precision.HIGHEST
    x32 = x.astype(jnp.float32)
    c32 = c.astype(jnp.float32)
    gamma = jnp.einsum('fc,bc->bf', w_gamma.astype(jnp.float32), c32,
                       precision=hp) + b_gamma
    beta = jnp.einsum('fc,bc->bf', w_beta.astype(jnp.float32), c32,
                      precision=hp) + b_beta
    B, F, T = x.shape
    xg = x32.reshape(B, groups, (F // groups) * T)
    mu = jnp.mean(xg, axis=-1, keepdims=True)
    var = jnp.mean((xg - mu) ** 2, axis=-1, keepdims=True)
    net = ((xg - mu) / jnp.sqrt(var + eps)).reshape(B, F, T)
    return gamma[:, :, None] * net + beta[:, :, None]


if __name__ == "__main__":
    def _check(B, c_dim, f_dim, T, groups, **kw):
        key = jax.random.PRNGKey(0)
        kx, kc, kwg, kwb, kbg, kbb = jax.random.split(key, 6)
        x = jax.random.normal(kx, (B, f_dim, T), jnp.float32)
        c = jax.random.normal(kc, (B, c_dim), jnp.float32)
        # reset_parameters() zero-inits the conv weights (gamma bias = 1,
        # beta bias = 0); perturb around that init so the conditional path is
        # actually exercised (the kernel handles arbitrary weights).
        w_gamma = 0.02 * jax.random.normal(kwg, (f_dim, c_dim), jnp.float32)
        w_beta = 0.02 * jax.random.normal(kwb, (f_dim, c_dim), jnp.float32)
        b_gamma = 1.0 + 0.02 * jax.random.normal(kbg, (f_dim,), jnp.float32)
        b_beta = 0.02 * jax.random.normal(kbb, (f_dim,), jnp.float32)

        fwd = jax.jit(partial(cbatchnorm1d, groups=groups, **kw))
        out = fwd(x, c, w_gamma, b_gamma, w_beta, b_beta)
        jax.block_until_ready(out)

        ref = _reference(x, c, w_gamma, b_gamma, w_beta, b_beta, groups=groups)
        err = float(jnp.max(jnp.abs(out - ref)))
        assert out.shape == (B, f_dim, T) and out.dtype == x.dtype
        assert err < 2e-3, "max abs err = %g" % err

    # Small shapes consistent with the module (f_dim divisible by the 8
    # GroupNorm groups, T lane-dense / multiple of 128).
    _check(2, 64, 64, 384, 8, block_t=128, group_blocks=1)  # multi-T-tile path
    _check(1, 64, 64, 256, 8, block_t=128)                  # B=1 -> group-parallel path
    _check(2, 32, 64, 128, 8)                               # single-T-tile, auto config
    print("KERNEL_OK")
</pallas_src>

<mosaic_0001>
module attributes {stable_mosaic.version = 11 : i64} {
  func.func @_cbn_kernel(%arg0: i32, %arg1: i32, %arg2: i32, %arg3: i32, %arg4: memref<2x64x2xf32, #tpu.memory_space<vmem>>, %arg5: memref<2x64x128xf32, #tpu.memory_space<vmem>>, %arg6: memref<2x64x128xf32, #tpu.memory_space<vmem>>, %arg7: memref<2x64x1xf32, #tpu.memory_space<vmem>>, %arg8: memref<2x64x1xf32, #tpu.memory_space<vmem>>) attributes {dimension_semantics = [#tpu.dimension_semantics<parallel>, #tpu.dimension_semantics<parallel>, #tpu.dimension_semantics<arbitrary>, #tpu.dimension_semantics<arbitrary>], iteration_bounds = array<i64: 1, 1, 2, 3>, scalar_prefetch = 0 : i64, scratch_operands = 2 : i64, tpu.core_type = #tpu.core_type<tc>, window_params = [{transform_indices = @transform_0, window_bounds = array<i64: 2, 64, 2>}, {transform_indices = @transform_1, window_bounds = array<i64: 2, 64, 128>}, {transform_indices = @transform_2, window_bounds = array<i64: 2, 64, 128>}]} {
    %c0_i32 = arith.constant 0 : i32
    %0 = arith.cmpi eq, %arg2, %c0_i32 : i32
    %1 = arith.extui %0 : i1 to i32
    %c0_i32_0 = arith.constant 0 : i32
    %2 = arith.cmpi ne, %1, %c0_i32_0 : i32
    scf.if %2 {
      %c0_i32_5 = arith.constant 0 : i32
      %11 = arith.cmpi eq, %arg3, %c0_i32_5 : i32
      %12 = arith.extui %11 : i1 to i32
      %c0_i32_6 = arith.constant 0 : i32
      %13 = arith.cmpi ne, %12, %c0_i32_6 : i32
      scf.if %13 {
        %cst_25 = arith.constant 0.000000e+00 : f32
        %27 = vector.broadcast %cst_25 : f32 to vector<2x64x1xf32>
        %c0_26 = arith.constant 0 : index
        %c0_27 = arith.constant 0 : index
        %c0_28 = arith.constant 0 : index
        %28 = vector.load %arg7[%c0_26, %c0_27, %c0_28] : memref<2x64x1xf32, #tpu.memory_space<vmem>>, vector<2x64x1xf32>
        tpu.vector_store %arg7[%c0_26, %c0_27, %c0_28], %27 {strides = array<i32>} : memref<2x64x1xf32, #tpu.memory_space<vmem>>, vector<2x64x1xf32>,
        %cst_29 = arith.constant 0.000000e+00 : f32
        %29 = vector.broadcast %cst_29 : f32 to vector<2x64x1xf32>
        %c0_30 = arith.constant 0 : index
        %c0_31 = arith.constant 0 : index
        %c0_32 = arith.constant 0 : index
        %30 = vector.load %arg8[%c0_30, %c0_31, %c0_32] : memref<2x64x1xf32, #tpu.memory_space<vmem>>, vector<2x64x1xf32>
        tpu.vector_store %arg8[%c0_30, %c0_31, %c0_32], %29 {strides = array<i32>} : memref<2x64x1xf32, #tpu.memory_space<vmem>>, vector<2x64x1xf32>,
      } else {
      }
      %c0 = arith.constant 0 : index
      %c0_7 = arith.constant 0 : index
      %c0_8 = arith.constant 0 : index
      %14 = vector.load %arg7[%c0, %c0_7, %c0_8] : memref<2x64x1xf32, #tpu.memory_space<vmem>>, vector<2x64x1xf32>
      %c0_9 = arith.constant 0 : index
      %c0_10 = arith.constant 0 : index
      %c0_11 = arith.constant 0 : index
      %15 = vector.load %arg5[%c0_9, %c0_10, %c0_11] : memref<2x64x128xf32, #tpu.memory_space<vmem>>, vector<2x64x128xf32>
      %cst = arith.constant dense<0.000000e+00> : vector<2x64xf32>
      %16 = vector.multi_reduction <add>, %15, %cst [2] : vector<2x64x128xf32> to vector<2x64xf32>
      %17 = vector.shape_cast %16 : vector<2x64xf32> to vector<2x64x1xf32>
      %18 = arith.addf %14, %17 : vector<2x64x1xf32>
      %c0_12 = arith.constant 0 : index
      %c0_13 = arith.constant 0 : index
      %c0_14 = arith.constant 0 : index
      %19 = vector.load %arg7[%c0_12, %c0_13, %c0_14] : memref<2x64x1xf32, #tpu.memory_space<vmem>>, vector<2x64x1xf32>
      tpu.vector_store %arg7[%c0_12, %c0_13, %c0_14], %18 {strides = array<i32>} : memref<2x64x1xf32, #tpu.memory_space<vmem>>, vector<2x64x1xf32>,
      %c0_15 = arith.constant 0 : index
      %c0_16 = arith.constant 0 : index
      %c0_17 = arith.constant 0 : index
      %20 = vector.load %arg5[%c0_15, %c0_16, %c0_17] : memref<2x64x128xf32, #tpu.memory_space<vmem>>, vector<2x64x128xf32>
      %c0_18 = arith.constant 0 : index
      %c0_19 = arith.constant 0 : index
      %c0_20 = arith.constant 0 : index
      %21 = vector.load %arg8[%c0_18, %c0_19, %c0_20] : memref<2x64x1xf32, #tpu.memory_space<vmem>>, vector<2x64x1xf32>
      %22 = arith.mulf %20, %20 : vector<2x64x128xf32>
      %cst_21 = arith.constant dense<0.000000e+00> : vector<2x64xf32>
      %23 = vector.multi_reduction <add>, %22, %cst_21 [2] : vector<2x64x128xf32> to vector<2x64xf32>
      %24 = vector.shape_cast %23 : vector<2x64xf32> to vector<2x64x1xf32>
      %25 = arith.addf %21, %24 : vector<2x64x1xf32>
      %c0_22 = arith.constant 0 : index
      %c0_23 = arith.constant 0 : index
      %c0_24 = arith.constant 0 : index
      %26 = vector.load %arg8[%c0_22, %c0_23, %c0_24] : memref<2x64x1xf32, #tpu.memory_space<vmem>>, vector<2x64x1xf32>
      tpu.vector_store %arg8[%c0_22, %c0_23, %c0_24], %25 {strides = array<i32>} : memref<2x64x1xf32, #tpu.memory_space<vmem>>, vector<2x64x1xf32>,
    } else {
    }
    %c1_i32 = arith.constant 1 : i32
    %3 = arith.cmpi eq, %arg2, %c1_i32 : i32
    %c0_i32_1 = arith.constant 0 : i32
    %4 = arith.cmpi eq, %arg3, %c0_i32_1 : i32
    %5 = arith.andi %3, %4 : i1
    %6 = arith.extui %5 : i1 to i32
    %c0_i32_2 = arith.constant 0 : i32
    %7 = arith.cmpi ne, %6, %c0_i32_2 : i32
    scf.if %7 {
      %c0 = arith.constant 0 : index
      %c0_5 = arith.constant 0 : index
      %c0_6 = arith.constant 0 : index
      %11 = vector.load %arg7[%c0, %c0_5, %c0_6] : memref<2x64x1xf32, #tpu.memory_space<vmem>>, vector<2x64x1xf32>
      %c0_7 = arith.constant 0 : index
      %c0_8 = arith.constant 0 : index
      %c0_9 = arith.constant 0 : index
      %12 = vector.load %arg8[%c0_7, %c0_8, %c0_9] : memref<2x64x1xf32, #tpu.memory_space<vmem>>, vector<2x64x1xf32>
      %c0_10 = arith.constant 0 : index
      %c0_11 = arith.constant 0 : index
      %c0_12 = arith.constant 0 : index
      %13 = vector.load %arg4[%c0_10, %c0_11, %c0_12] : memref<2x64x2xf32, #tpu.memory_space<vmem>>, vector<2x64x1xf32>
      %c0_13 = arith.constant 0 : index
      %c0_14 = arith.constant 0 : index
      %c1 = arith.constant 1 : index
      %14 = vector.load %arg4[%c0_13, %c0_14, %c1] : memref<2x64x2xf32, #tpu.memory_space<vmem>>, vector<2x64x1xf32>
      %15 = vector.extract_strided_slice %11 {offsets = [0, 0, 0], sizes = [2, 8, 1], strides = [1, 1, 1]} : vector<2x64x1xf32> to vector<2x8x1xf32>
      %cst = arith.constant dense<0.000000e+00> : vector<2x1xf32>
      %16 = vector.multi_reduction <add>, %15, %cst [1] : vector<2x8x1xf32> to vector<2x1xf32>
      %17 = vector.shape_cast %16 : vector<2x1xf32> to vector<2x1x1xf32>
      %18 = vector.extract_strided_slice %12 {offsets = [0, 0, 0], sizes = [2, 8, 1], strides = [1, 1, 1]} : vector<2x64x1xf32> to vector<2x8x1xf32>
      %cst_15 = arith.constant dense<0.000000e+00> : vector<2x1xf32>
      %19 = vector.multi_reduction <add>, %18, %cst_15 [1] : vector<2x8x1xf32> to vector<2x1xf32>
      %20 = vector.shape_cast %19 : vector<2x1xf32> to vector<2x1x1xf32>
      %cst_16 = arith.constant 3.25520843E-4 : f32
      %21 = vector.broadcast %cst_16 : f32 to vector<2x1x1xf32>
      %22 = arith.mulf %17, %21 : vector<2x1x1xf32>
      %cst_17 = arith.constant 3.25520843E-4 : f32
      %23 = vector.broadcast %cst_17 : f32 to vector<2x1x1xf32>
      %24 = arith.mulf %20, %23 : vector<2x1x1xf32>
      %25 = arith.mulf %22, %22 : vector<2x1x1xf32>
      %26 = arith.subf %24, %25 : vector<2x1x1xf32>
      %cst_18 = arith.constant 0.000000e+00 : f32
      %27 = vector.broadcast %cst_18 : f32 to vector<2x1x1xf32>
      %28 = arith.maximumf %26, %27 : vector<2x1x1xf32>
      %cst_19 = arith.constant 9.99999974E-6 : f32
      %29 = vector.broadcast %cst_19 : f32 to vector<2x1x1xf32>
      %30 = arith.addf %28, %29 : vector<2x1x1xf32>
      %31 = math.rsqrt %30 : vector<2x1x1xf32>
      %32 = vector.extract_strided_slice %13 {offsets = [0, 0, 0], sizes = [2, 8, 1], strides = [1, 1, 1]} : vector<2x64x1xf32> to vector<2x8x1xf32>
      %33 = vector.broadcast %31 : vector<2x1x1xf32> to vector<2x8x1xf32>
      %34 = arith.mulf %32, %33 : vector<2x8x1xf32>
      %c0_20 = arith.constant 0 : index
      %c0_21 = arith.constant 0 : index
      %c0_22 = arith.constant 0 : index
      %35 = vector.load %arg7[%c0_20, %c0_21, %c0_22] : memref<2x64x1xf32, #tpu.memory_space<vmem>>, vector<2x8x1xf32>
      tpu.vector_store %arg7[%c0_20, %c0_21, %c0_22], %34 {strides = array<i32>} : memref<2x64x1xf32, #tpu.memory_space<vmem>>, vector<2x8x1xf32>,
      %36 = vector.extract_strided_slice %14 {offsets = [0, 0, 0], sizes = [2, 8, 1], strides = [1, 1, 1]} : vector<2x64x1xf32> to vector<2x8x1xf32>
      %37 = vector.broadcast %22 : vector<2x1x1xf32> to vector<2x8x1xf32>
      %38 = arith.mulf %34, %37 : vector<2x8x1xf32>
      %39 = arith.subf %36, %38 : vector<2x8x1xf32>
      %c0_23 = arith.constant 0 : index
      %c0_24 = arith.constant 0 : index
      %c0_25 = arith.constant 0 : index
      %40 = vector.load %arg8[%c0_23, %c0_24, %c0_25] : memref<2x64x1xf32, #tpu.memory_space<vmem>>, vector<2x8x1xf32>
      tpu.vector_store %arg8[%c0_23, %c0_24, %c0_25], %39 {strides = array<i32>} : memref<2x64x1xf32, #tpu.memory_space<vmem>>, vector<2x8x1xf32>,
      %41 = vector.extract_strided_slice %11 {offsets = [0, 8, 0], sizes = [2, 8, 1], strides = [1, 1, 1]} : vector<2x64x1xf32> to vector<2x8x1xf32>
      %cst_26 = arith.constant dense<0.000000e+00> : vector<2x1xf32>
      %42 = vector.multi_reduction <add>, %41, %cst_26 [1] : vector<2x8x1xf32> to vector<2x1xf32>
      %43 = vector.shape_cast %42 : vector<2x1xf32> to vector<2x1x1xf32>
      %44 = vector.extract_strided_slice %12 {offsets = [0, 8, 0], sizes = [2, 8, 1], strides = [1, 1, 1]} : vector<2x64x1xf32> to vector<2x8x1xf32>
      %cst_27 = arith.constant dense<0.000000e+00> : vector<2x1xf32>
      %45 = vector.multi_reduction <add>, %44, %cst_27 [1] : vector<2x8x1xf32> to vector<2x1xf32>
      %46 = vector.shape_cast %45 : vector<2x1xf32> to vector<2x1x1xf32>
      %cst_28 = arith.constant 3.25520843E-4 : f32
      %47 = vector.broadcast %cst_28 : f32 to vector<2x1x1xf32>
      %48 = arith.mulf %43, %47 : vector<2x1x1xf32>
      %cst_29 = arith.constant 3.25520843E-4 : f32
      %49 = vector.broadcast %cst_29 : f32 to vector<2x1x1xf32>
      %50 = arith.mulf %46, %49 : vector<2x1x1xf32>
      %51 = arith.mulf %48, %48 : vector<2x1x1xf32>
      %52 = arith.subf %50, %51 : vector<2x1x1xf32>
      %cst_30 = arith.constant 0.000000e+00 : f32
      %53 = vector.broadcast %cst_30 : f32 to vector<2x1x1xf32>
      %54 = arith.maximumf %52, %53 : vector<2x1x1xf32>
      %cst_31 = arith.constant 9.99999974E-6 : f32
      %55 = vector.broadcast %cst_31 : f32 to vector<2x1x1xf32>
      %56 = arith.addf %54, %55 : vector<2x1x1xf32>
      %57 = math.rsqrt %56 : vector<2x1x1xf32>
      %58 = vector.extract_strided_slice %13 {offsets = [0, 8, 0], sizes = [2, 8, 1], strides = [1, 1, 1]} : vector<2x64x1xf32> to vector<2x8x1xf32>
      %59 = vector.broadcast %57 : vector<2x1x1xf32> to vector<2x8x1xf32>
      %60 = arith.mulf %58, %59 : vector<2x8x1xf32>
      %c0_32 = arith.constant 0 : index
      %c8 = arith.constant 8 : index
      %c0_33 = arith.constant 0 : index
      %61 = vector.load %arg7[%c0_32, %c8, %c0_33] : memref<2x64x1xf32, #tpu.memory_space<vmem>>, vector<2x8x1xf32>
      tpu.vector_store %arg7[%c0_32, %c8, %c0_33], %60 {strides = array<i32>} : memref<2x64x1xf32, #tpu.memory_space<vmem>>, vector<2x8x1xf32>,
      %62 = vector.extract_strided_slice %14 {offsets = [0, 8, 0], sizes = [2, 8, 1], strides = [1, 1, 1]} : vector<2x64x1xf32> to vector<2x8x1xf32>
      %63 = vector.broadcast %48 : vector<2x1x1xf32> to vector<2x8x1xf32>
      %64 = arith.mulf %60, %63 : vector<2x8x1xf32>
      %65 = arith.subf %62, %64 : vector<2x8x1xf32>
      %c0_34 = arith.constant 0 : index
      %c8_35 = arith.constant 8 : index
      %c0_36 = arith.constant 0 : index
      %66 = vector.load %arg8[%c0_34, %c8_35, %c0_36] : memref<2x64x1xf32, #tpu.memory_space<vmem>>, vector<2x8x1xf32>
      tpu.vector_store %arg8[%c0_34, %c8_35, %c0_36], %65 {strides = array<i32>} : memref<2x64x1xf32, #tpu.memory_space<vmem>>, vector<2x8x1xf32>,
      %67 = vector.extract_strided_slice %11 {offsets = [0, 16, 0], sizes = [2, 8, 1], strides = [1, 1, 1]} : vector<2x64x1xf32> to vector<2x8x1xf32>
      %cst_37 = arith.constant dense<0.000000e+00> : vector<2x1xf32>
      %68 = vector.multi_reduction <add>, %67, %cst_37 [1] : vector<2x8x1xf32> to vector<2x1xf32>
      %69 = vector.shape_cast %68 : vector<2x1xf32> to vector<2x1x1xf32>
      %70 = vector.extract_strided_slice %12 {offsets = [0, 16, 0], sizes = [2, 8, 1], strides = [1, 1, 1]} : vector<2x64x1xf32> to vector<2x8x1xf32>
      %cst_38 = arith.constant dense<0.000000e+00> : vector<2x1xf32>
      %71 = vector.multi_reduction <add>, %70, %cst_38 [1] : vector<2x8x1xf32> to vector<2x1xf32>
      %72 = vector.shape_cast %71 : vector<2x1xf32> to vector<2x1x1xf32>
      %cst_39 = arith.constant 3.25520843E-4 : f32
      %73 = vector.broadcast %cst_39 : f32 to vector<2x1x1xf32>
      %74 = arith.mulf %69, %73 : vector<2x1x1xf32>
      %cst_40 = arith.constant 3.25520843E-4 : f32
      %75 = vector.broadcast %cst_40 : f32 to vector<2x1x1xf32>
      %76 = arith.mulf %72, %75 : vector<2x1x1xf32>
      %77 = arith.mulf %74, %74 : vector<2x1x1xf32>
      %78 = arith.subf %76, %77 : vector<2x1x1xf32>
      %cst_41 = arith.constant 0.000000e+00 : f32
      %79 = vector.broadcast %cst_41 : f32 to vector<2x1x1xf32>
      %80 = arith.maximumf %78, %79 : vector<2x1x1xf32>
      %cst_42 = arith.constant 9.99999974E-6 : f32
      %81 = vector.broadcast %cst_42 : f32 to vector<2x1x1xf32>
      %82 = arith.addf %80, %81 : vector<2x1x1xf32>
      %83 = math.rsqrt %82 : vector<2x1x1xf32>
      %84 = vector.extract_strided_slice %13 {offsets = [0, 16, 0], sizes = [2, 8, 1], strides = [1, 1, 1]} : vector<2x64x1xf32> to vector<2x8x1xf32>
      %85 = vector.broadcast %83 : vector<2x1x1xf32> to vector<2x8x1xf32>
      %86 = arith.mulf %84, %85 : vector<2x8x1xf32>
      %c0_43 = arith.constant 0 : index
      %c16 = arith.constant 16 : index
      %c0_44 = arith.constant 0 : index
      %87 = vector.load %arg7[%c0_43, %c16, %c0_44] : memref<2x64x1xf32, #tpu.memory_space<vmem>>, vector<2x8x1xf32>
      tpu.vector_store %arg7[%c0_43, %c16, %c0_44], %86 {strides = array<i32>} : memref<2x64x1xf32, #tpu.memory_space<vmem>>, vector<2x8x1xf32>,
      %88 = vector.extract_strided_slice %14 {offsets = [0, 16, 0], sizes = [2, 8, 1], strides = [1, 1, 1]} : vector<2x64x1xf32> to vector<2x8x1xf32>
      %89 = vector.broadcast %74 : vector<2x1x1xf32> to vector<2x8x1xf32>
      %90 = arith.mulf %86, %89 : vector<2x8x1xf32>
      %91 = arith.subf %88, %90 : vector<2x8x1xf32>
      %c0_45 = arith.constant 0 : index
      %c16_46 = arith.constant 16 : index
      %c0_47 = arith.constant 0 : index
      %92 = vector.load %arg8[%c0_45, %c16_46, %c0_47] : memref<2x64x1xf32, #tpu.memory_space<vmem>>, vector<2x8x1xf32>
      tpu.vector_store %arg8[%c0_45, %c16_46, %c0_47], %91 {strides = array<i32>} : memref<2x64x1xf32, #tpu.memory_space<vmem>>, vector<2x8x1xf32>,
      %93 = vector.extract_strided_slice %11 {offsets = [0, 24, 0], sizes = [2, 8, 1], strides = [1, 1, 1]} : vector<2x64x1xf32> to vector<2x8x1xf32>
      %cst_48 = arith.constant dense<0.000000e+00> : vector<2x1xf32>
      %94 = vector.multi_reduction <add>, %93, %cst_48 [1] : vector<2x8x1xf32> to vector<2x1xf32>
      %95 = vector.shape_cast %94 : vector<2x1xf32> to vector<2x1x1xf32>
      %96 = vector.extract_strided_slice %12 {offsets = [0, 24, 0], sizes = [2, 8, 1], strides = [1, 1, 1]} : vector<2x64x1xf32> to vector<2x8x1xf32>
      %cst_49 = arith.constant dense<0.000000e+00> : vector<2x1xf32>
      %97 = vector.multi_reduction <add>, %96, %cst_49 [1] : vector<2x8x1xf32> to vector<2x1xf32>
      %98 = vector.shape_cast %97 : vector<2x1xf32> to vector<2x1x1xf32>
      %cst_50 = arith.constant 3.25520843E-4 : f32
      %99 = vector.broadcast %cst_50 : f32 to vector<2x1x1xf32>
      %100 = arith.mulf %95, %99 : vector<2x1x1xf32>
      %cst_51 = arith.constant 3.25520843E-4 : f32
      %101 = vector.broadcast %cst_51 : f32 to vector<2x1x1xf32>
      %102 = arith.mulf %98, %101 : vector<2x1x1xf32>
      %103 = arith.mulf %100, %100 : vector<2x1x1xf32>
      %104 = arith.subf %102, %103 : vector<2x1x1xf32>
      %cst_52 = arith.constant 0.000000e+00 : f32
      %105 = vector.broadcast %cst_52 : f32 to vector<2x1x1xf32>
      %106 = arith.maximumf %104, %105 : vector<2x1x1xf32>
      %cst_53 = arith.constant 9.99999974E-6 : f32
      %107 = vector.broadcast %cst_53 : f32 to vector<2x1x1xf32>
      %108 = arith.addf %106, %107 : vector<2x1x1xf32>
      %109 = math.rsqrt %108 : vector<2x1x1xf32>
      %110 = vector.extract_strided_slice %13 {offsets = [0, 24, 0], sizes = [2, 8, 1], strides = [1, 1, 1]} : vector<2x64x1xf32> to vector<2x8x1xf32>
      %111 = vector.broadcast %109 : vector<2x1x1xf32> to vector<2x8x1xf32>
      %112 = arith.mulf %110, %111 : vector<2x8x1xf32>
      %c0_54 = arith.constant 0 : index
      %c24 = arith.constant 24 : index
      %c0_55 = arith.constant 0 : index
      %113 = vector.load %arg7[%c0_54, %c24, %c0_55] : memref<2x64x1xf32, #tpu.memory_space<vmem>>, vector<2x8x1xf32>
      tpu.vector_store %arg7[%c0_54, %c24, %c0_55], %112 {strides = array<i32>} : memref<2x64x1xf32, #tpu.memory_space<vmem>>, vector<2x8x1xf32>,
      %114 = vector.extract_strided_slice %14 {offsets = [0, 24, 0], sizes = [2, 8, 1], strides = [1, 1, 1]} : vector<2x64x1xf32> to vector<2x8x1xf32>
      %115 = vector.broadcast %100 : vector<2x1x1xf32> to vector<2x8x1xf32>
      %116 = arith.mulf %112, %115 : vector<2x8x1xf32>
      %117 = arith.subf %114, %116 : vector<2x8x1xf32>
      %c0_56 = arith.constant 0 : index
      %c24_57 = arith.constant 24 : index
      %c0_58 = arith.constant 0 : index
      %118 = vector.load %arg8[%c0_56, %c24_57, %c0_58] : memref<2x64x1xf32, #tpu.memory_space<vmem>>, vector<2x8x1xf32>
      tpu.vector_store %arg8[%c0_56, %c24_57, %c0_58], %117 {strides = array<i32>} : memref<2x64x1xf32, #tpu.memory_space<vmem>>, vector<2x8x1xf32>,
      %119 = vector.extract_strided_slice %11 {offsets = [0, 32, 0], sizes = [2, 8, 1], strides = [1, 1, 1]} : vector<2x64x1xf32> to vector<2x8x1xf32>
      %cst_59 = arith.constant dense<0.000000e+00> : vector<2x1xf32>
      %120 = vector.multi_reduction <add>, %119, %cst_59 [1] : vector<2x8x1xf32> to vector<2x1xf32>
      %121 = vector.shape_cast %120 : vector<2x1xf32> to vector<2x1x1xf32>
      %122 = vector.extract_strided_slice %12 {offsets = [0, 32, 0], sizes = [2, 8, 1], strides = [1, 1, 1]} : vector<2x64x1xf32> to vector<2x8x1xf32>
      %cst_60 = arith.constant dense<0.000000e+00> : vector<2x1xf32>
      %123 = vector.multi_reduction <add>, %122, %cst_60 [1] : vector<2x8x1xf32> to vector<2x1xf32>
      %124 = vector.shape_cast %123 : vector<2x1xf32> to vector<2x1x1xf32>
      %cst_61 = arith.constant 3.25520843E-4 : f32
      %125 = vector.broadcast %cst_61 : f32 to vector<2x1x1xf32>
      %126 = arith.mulf %121, %125 : vector<2x1x1xf32>
      %cst_62 = arith.constant 3.25520843E-4 : f32
      %127 = vector.broadcast %cst_62 : f32 to vector<2x1x1xf32>
      %128 = arith.mulf %124, %127 : vector<2x1x1xf32>
      %129 = arith.mulf %126, %126 : vector<2x1x1xf32>
      %130 = arith.subf %128, %129 : vector<2x1x1xf32>
      %cst_63 = arith.constant 0.000000e+00 : f32
      %131 = vector.broadcast %cst_63 : f32 to vector<2x1x1xf32>
      %132 = arith.maximumf %130, %131 : vector<2x1x1xf32>
      %cst_64 = arith.constant 9.99999974E-6 : f32
      %133 = vector.broadcast %cst_64 : f32 to vector<2x1x1xf32>
      %134 = arith.addf %132, %133 : vector<2x1x1xf32>
      %135 = math.rsqrt %134 : vector<2x1x1xf32>
      %136 = vector.extract_strided_slice %13 {offsets = [0, 32, 0], sizes = [2, 8, 1], strides = [1, 1, 1]} : vector<2x64x1xf32> to vector<2x8x1xf32>
      %137 = vector.broadcast %135 : vector<2x1x1xf32> to vector<2x8x1xf32>
      %138 = arith.mulf %136, %137 : vector<2x8x1xf32>
      %c0_65 = arith.constant 0 : index
      %c32 = arith.constant 32 : index
      %c0_66 = arith.constant 0 : index
      %139 = vector.load %arg7[%c0_65, %c32, %c0_66] : memref<2x64x1xf32, #tpu.memory_space<vmem>>, vector<2x8x1xf32>
      tpu.vector_store %arg7[%c0_65, %c32, %c0_66], %138 {strides = array<i32>} : memref<2x64x1xf32, #tpu.memory_space<vmem>>, vector<2x8x1xf32>,
      %140 = vector.extract_strided_slice %14 {offsets = [0, 32, 0], sizes = [2, 8, 1], strides = [1, 1, 1]} : vector<2x64x1xf32> to vector<2x8x1xf32>
      %141 = vector.broadcast %126 : vector<2x1x1xf32> to vector<2x8x1xf32>
      %142 = arith.mulf %138, %141 : vector<2x8x1xf32>
      %143 = arith.subf %140, %142 : vector<2x8x1xf32>
      %c0_67 = arith.constant 0 : index
      %c32_68 = arith.constant 32 : index
      %c0_69 = arith.constant 0 : index
      %144 = vector.load %arg8[%c0_67, %c32_68, %c0_69] : memref<2x64x1xf32, #tpu.memory_space<vmem>>, vector<2x8x1xf32>
      tpu.vector_store %arg8[%c0_67, %c32_68, %c0_69], %143 {strides = array<i32>} : memref<2x64x1xf32, #tpu.memory_space<vmem>>, vector<2x8x1xf32>,
      %145 = vector.extract_strided_slice %11 {offsets = [0, 40, 0], sizes = [2, 8, 1], strides = [1, 1, 1]} : vector<2x64x1xf32> to vector<2x8x1xf32>
      %cst_70 = arith.constant dense<0.000000e+00> : vector<2x1xf32>
      %146 = vector.multi_reduction <add>, %145, %cst_70 [1] : vector<2x8x1xf32> to vector<2x1xf32>
      %147 = vector.shape_cast %146 : vector<2x1xf32> to vector<2x1x1xf32>
      %148 = vector.extract_strided_slice %12 {offsets = [0, 40, 0], sizes = [2, 8, 1], strides = [1, 1, 1]} : vector<2x64x1xf32> to vector<2x8x1xf32>
      %cst_71 = arith.constant dense<0.000000e+00> : vector<2x1xf32>
      %149 = vector.multi_reduction <add>, %148, %cst_71 [1] : vector<2x8x1xf32> to vector<2x1xf32>
      %150 = vector.shape_cast %149 : vector<2x1xf32> to vector<2x1x1xf32>
      %cst_72 = arith.constant 3.25520843E-4 : f32
      %151 = vector.broadcast %cst_72 : f32 to vector<2x1x1xf32>
      %152 = arith.mulf %147, %151 : vector<2x1x1xf32>
      %cst_73 = arith.constant 3.25520843E-4 : f32
      %153 = vector.broadcast %cst_73 : f32 to vector<2x1x1xf32>
      %154 = arith.mulf %150, %153 : vector<2x1x1xf32>
      %155 = arith.mulf %152, %152 : vector<2x1x1xf32>
      %156 = arith.subf %154, %155 : vector<2x1x1xf32>
      %cst_74 = arith.constant 0.000000e+00 : f32
      %157 = vector.broadcast %cst_74 : f32 to vector<2x1x1xf32>
      %158 = arith.maximumf %156, %157 : vector<2x1x1xf32>
      %cst_75 = arith.constant 9.99999974E-6 : f32
      %159 = vector.broadcast %cst_75 : f32 to vector<2x1x1xf32>
      %160 = arith.addf %158, %159 : vector<2x1x1xf32>
      %161 = math.rsqrt %160 : vector<2x1x1xf32>
      %162 = vector.extract_strided_slice %13 {offsets = [0, 40, 0], sizes = [2, 8, 1], strides = [1, 1, 1]} : vector<2x64x1xf32> to vector<2x8x1xf32>
      %163 = vector.broadcast %161 : vector<2x1x1xf32> to vector<2x8x1xf32>
      %164 = arith.mulf %162, %163 : vector<2x8x1xf32>
      %c0_76 = arith.constant 0 : index
      %c40 = arith.constant 40 : index
      %c0_77 = arith.constant 0 : index
      %165 = vector.load %arg7[%c0_76, %c40, %c0_77] : memref<2x64x1xf32, #tpu.memory_space<vmem>>, vector<2x8x1xf32>
      tpu.vector_store %arg7[%c0_76, %c40, %c0_77], %164 {strides = array<i32>} : memref<2x64x1xf32, #tpu.memory_space<vmem>>, vector<2x8x1xf32>,
      %166 = vector.extract_strided_slice %14 {offsets = [0, 40, 0], sizes = [2, 8, 1], strides = [1, 1, 1]} : vector<2x64x1xf32> to vector<2x8x1xf32>
      %167 = vector.broadcast %152 : vector<2x1x1xf32> to vector<2x8x1xf32>
      %168 = arith.mulf %164, %167 : vector<2x8x1xf32>
      %169 = arith.subf %166, %168 : vector<2x8x1xf32>
      %c0_78 = arith.constant 0 : index
      %c40_79 = arith.constant 40 : index
      %c0_80 = arith.constant 0 : index
      %170 = vector.load %arg8[%c0_78, %c40_79, %c0_80] : memref<2x64x1xf32, #tpu.memory_space<vmem>>, vector<2x8x1xf32>
      tpu.vector_store %arg8[%c0_78, %c40_79, %c0_80], %169 {strides = array<i32>} : memref<2x64x1xf32, #tpu.memory_space<vmem>>, vector<2x8x1xf32>,
      %171 = vector.extract_strided_slice %11 {offsets = [0, 48, 0], sizes = [2, 8, 1], strides = [1, 1, 1]} : vector<2x64x1xf32> to vector<2x8x1xf32>
      %cst_81 = arith.constant dense<0.000000e+00> : vector<2x1xf32>
      %172 = vector.multi_reduction <add>, %171, %cst_81 [1] : vector<2x8x1xf32> to vector<2x1xf32>
      %173 = vector.shape_cast %172 : vector<2x1xf32> to vector<2x1x1xf32>
      %174 = vector.extract_strided_slice %12 {offsets = [0, 48, 0], sizes = [2, 8, 1], strides = [1, 1, 1]} : vector<2x64x1xf32> to vector<2x8x1xf32>
      %cst_82 = arith.constant dense<0.000000e+00> : vector<2x1xf32>
      %175 = vector.multi_reduction <add>, %174, %cst_82 [1] : vector<2x8x1xf32> to vector<2x1xf32>
      %176 = vector.shape_cast %175 : vector<2x1xf32> to vector<2x1x1xf32>
      %cst_83 = arith.constant 3.25520843E-4 : f32
      %177 = vector.broadcast %cst_83 : f32 to vector<2x1x1xf32>
      %178 = arith.mulf %173, %177 : vector<2x1x1xf32>
      %cst_84 = arith.constant 3.25520843E-4 : f32
      %179 = vector.broadcast %cst_84 : f32 to vector<2x1x1xf32>
      %180 = arith.mulf %176, %179 : vector<2x1x1xf32>
      %181 = arith.mulf %178, %178 : vector<2x1x1xf32>
      %182 = arith.subf %180, %181 : vector<2x1x1xf32>
      %cst_85 = arith.constant 0.000000e+00 : f32
      %183 = vector.broadcast %cst_85 : f32 to vector<2x1x1xf32>
      %184 = arith.maximumf %182, %183 : vector<2x1x1xf32>
      %cst_86 = arith.constant 9.99999974E-6 : f32
      %185 = vector.broadcast %cst_86 : f32 to vector<2x1x1xf32>
      %186 = arith.addf %184, %185 : vector<2x1x1xf32>
      %187 = math.rsqrt %186 : vector<2x1x1xf32>
      %188 = vector.extract_strided_slice %13 {offsets = [0, 48, 0], sizes = [2, 8, 1], strides = [1, 1, 1]} : vector<2x64x1xf32> to vector<2x8x1xf32>
      %189 = vector.broadcast %187 : vector<2x1x1xf32> to vector<2x8x1xf32>
      %190 = arith.mulf %188, %189 : vector<2x8x1xf32>
      %c0_87 = arith.constant 0 : index
      %c48 = arith.constant 48 : index
      %c0_88 = arith.constant 0 : index
      %191 = vector.load %arg7[%c0_87, %c48, %c0_88] : memref<2x64x1xf32, #tpu.memory_space<vmem>>, vector<2x8x1xf32>
      tpu.vector_store %arg7[%c0_87, %c48, %c0_88], %190 {strides = array<i32>} : memref<2x64x1xf32, #tpu.memory_space<vmem>>, vector<2x8x1xf32>,
      %192 = vector.extract_strided_slice %14 {offsets = [0, 48, 0], sizes = [2, 8, 1], strides = [1, 1, 1]} : vector<2x64x1xf32> to vector<2x8x1xf32>
      %193 = vector.broadcast %178 : vector<2x1x1xf32> to vector<2x8x1xf32>
      %194 = arith.mulf %190, %193 : vector<2x8x1xf32>
      %195 = arith.subf %192, %194 : vector<2x8x1xf32>
      %c0_89 = arith.constant 0 : index
      %c48_90 = arith.constant 48 : index
      %c0_91 = arith.constant 0 : index
      %196 = vector.load %arg8[%c0_89, %c48_90, %c0_91] : memref<2x64x1xf32, #tpu.memory_space<vmem>>, vector<2x8x1xf32>
      tpu.vector_store %arg8[%c0_89, %c48_90, %c0_91], %195 {strides = array<i32>} : memref<2x64x1xf32, #tpu.memory_space<vmem>>, vector<2x8x1xf32>,
      %197 = vector.extract_strided_slice %11 {offsets = [0, 56, 0], sizes = [2, 8, 1], strides = [1, 1, 1]} : vector<2x64x1xf32> to vector<2x8x1xf32>
      %cst_92 = arith.constant dense<0.000000e+00> : vector<2x1xf32>
      %198 = vector.multi_reduction <add>, %197, %cst_92 [1] : vector<2x8x1xf32> to vector<2x1xf32>
      %199 = vector.shape_cast %198 : vector<2x1xf32> to vector<2x1x1xf32>
      %200 = vector.extract_strided_slice %12 {offsets = [0, 56, 0], sizes = [2, 8, 1], strides = [1, 1, 1]} : vector<2x64x1xf32> to vector<2x8x1xf32>
      %cst_93 = arith.constant dense<0.000000e+00> : vector<2x1xf32>
      %201 = vector.multi_reduction <add>, %200, %cst_93 [1] : vector<2x8x1xf32> to vector<2x1xf32>
      %202 = vector.shape_cast %201 : vector<2x1xf32> to vector<2x1x1xf32>
      %cst_94 = arith.constant 3.25520843E-4 : f32
      %203 = vector.broadcast %cst_94 : f32 to vector<2x1x1xf32>
      %204 = arith.mulf %199, %203 : vector<2x1x1xf32>
      %cst_95 = arith.constant 3.25520843E-4 : f32
      %205 = vector.broadcast %cst_95 : f32 to vector<2x1x1xf32>
      %206 = arith.mulf %202, %205 : vector<2x1x1xf32>
      %207 = arith.mulf %204, %204 : vector<2x1x1xf32>
      %208 = arith.subf %206, %207 : vector<2x1x1xf32>
      %cst_96 = arith.constant 0.000000e+00 : f32
      %209 = vector.broadcast %cst_96 : f32 to vector<2x1x1xf32>
      %210 = arith.maximumf %208, %209 : vector<2x1x1xf32>
      %cst_97 = arith.constant 9.99999974E-6 : f32
      %211 = vector.broadcast %cst_97 : f32 to vector<2x1x1xf32>
      %212 = arith.addf %210, %211 : vector<2x1x1xf32>
      %213 = math.rsqrt %212 : vector<2x1x1xf32>
      %214 = vector.extract_strided_slice %13 {offsets = [0, 56, 0], sizes = [2, 8, 1], strides = [1, 1, 1]} : vector<2x64x1xf32> to vector<2x8x1xf32>
      %215 = vector.broadcast %213 : vector<2x1x1xf32> to vector<2x8x1xf32>
      %216 = arith.mulf %214, %215 : vector<2x8x1xf32>
      %c0_98 = arith.constant 0 : index
      %c56 = arith.constant 56 : index
      %c0_99 = arith.constant 0 : index
      %217 = vector.load %arg7[%c0_98, %c56, %c0_99] : memref<2x64x1xf32, #tpu.memory_space<vmem>>, vector<2x8x1xf32>
      tpu.vector_store %arg7[%c0_98, %c56, %c0_99], %216 {strides = array<i32>} : memref<2x64x1xf32, #tpu.memory_space<vmem>>, vector<2x8x1xf32>,
      %218 = vector.extract_strided_slice %14 {offsets = [0, 56, 0], sizes = [2, 8, 1], strides = [1, 1, 1]} : vector<2x64x1xf32> to vector<2x8x1xf32>
      %219 = vector.broadcast %204 : vector<2x1x1xf32> to vector<2x8x1xf32>
      %220 = arith.mulf %216, %219 : vector<2x8x1xf32>
      %221 = arith.subf %218, %220 : vector<2x8x1xf32>
      %c0_100 = arith.constant 0 : index
      %c56_101 = arith.constant 56 : index
      %c0_102 = arith.constant 0 : index
      %222 = vector.load %arg8[%c0_100, %c56_101, %c0_102] : memref<2x64x1xf32, #tpu.memory_space<vmem>>, vector<2x8x1xf32>
      tpu.vector_store %arg8[%c0_100, %c56_101, %c0_102], %221 {strides = array<i32>} : memref<2x64x1xf32, #tpu.memory_space<vmem>>, vector<2x8x1xf32>,
    } else {
    }
    %c1_i32_3 = arith.constant 1 : i32
    %8 = arith.cmpi eq, %arg2, %c1_i32_3 : i32
    %9 = arith.extui %8 : i1 to i32
    %c0_i32_4 = arith.constant 0 : i32
    %10 = arith.cmpi ne, %9, %c0_i32_4 : i32
    scf.if %10 {
      %c0 = arith.constant 0 : index
      %c0_5 = arith.constant 0 : index
      %c0_6 = arith.constant 0 : index
      %11 = vector.load %arg5[%c0, %c0_5, %c0_6] : memref<2x64x128xf32, #tpu.memory_space<vmem>>, vector<2x64x128xf32>
      %c0_7 = arith.constant 0 : index
      %c0_8 = arith.constant 0 : index
      %c0_9 = arith.constant 0 : index
      %12 = vector.load %arg7[%c0_7, %c0_8, %c0_9] : memref<2x64x1xf32, #tpu.memory_space<vmem>>, vector<2x64x1xf32>
      %13 = vector.broadcast %12 : vector<2x64x1xf32> to vector<2x64x128xf32>
      %14 = arith.mulf %11, %13 : vector<2x64x128xf32>
      %c0_10 = arith.constant 0 : index
      %c0_11 = arith.constant 0 : index
      %c0_12 = arith.constant 0 : index
      %15 = vector.load %arg8[%c0_10, %c0_11, %c0_12] : memref<2x64x1xf32, #tpu.memory_space<vmem>>, vector<2x64x1xf32>
      %16 = vector.broadcast %15 : vector<2x64x1xf32> to vector<2x64x128xf32>
      %17 = arith.addf %14, %16 : vector<2x64x128xf32>
      %c0_13 = arith.constant 0 : index
      %c0_14 = arith.constant 0 : index
      %c0_15 = arith.constant 0 : index
      %18 = vector.load %arg6[%c0_13, %c0_14, %c0_15] : memref<2x64x128xf32, #tpu.memory_space<vmem>>, vector<2x64x128xf32>
      tpu.vector_store %arg6[%c0_13, %c0_14, %c0_15], %17 {strides = array<i32>} : memref<2x64x128xf32, #tpu.memory_space<vmem>>, vector<2x64x128xf32>,
    } else {
    }
    return
  }
  func.func @transform_0(%arg0: i32, %arg1: i32, %arg2: i32, %arg3: i32) -> (i32, i32, i32) {
    %c0_i32 = arith.constant 0 : i32
    %c0_i32_0 = arith.constant 0 : i32
    return %arg0, %arg1, %c0_i32 : i32, i32, i32
  }
  func.func @transform_1(%arg0: i32, %arg1: i32, %arg2: i32, %arg3: i32) -> (i32, i32, i32) {
    %c0_i32 = arith.constant 0 : i32
    return %arg0, %arg1, %arg3 : i32, i32, i32
  }
  func.func @transform_2(%arg0: i32, %arg1: i32, %arg2: i32, %arg3: i32) -> (i32, i32, i32) {
    %0 = arith.muli %arg3, %arg2 : i32
    %c0_i32 = arith.constant 0 : i32
    return %arg0, %arg1, %0 : i32, i32, i32
  }
}

</mosaic_0001>

<llo_original>
// kernel: cbatchnorm1d.1
$region0: #{cbatchnorm1d.1}
  #allocation0 [shape = 'u32[]', space=smem, size = 0x4, offset = 0x4, fixed_abs, tag = 'smem constant byte address 0x4 - core index']
  #allocation1 [shape = 'u32[144,128]{1,0:T(1,128)}', space=vmem, size = 0x12000, scoped, tag = 'internal scratch']
  #allocation2 [shape = 'f32[2,64,1]{2,1,0:T(8,128)}', space=vmem, size = 0x10000, scoped, tag = 'scratch operand']
  #allocation3 [shape = 'f32[2,64,1]{2,1,0:T(8,128)}', space=vmem, size = 0x10000, scoped, tag = 'scratch operand']
  %s0 = inlined_call_operand.vmem [shape: f32[2,64,2], index: 0, kind: input, shape index: {}]
  %s1 = inlined_call_operand.vmem [shape: f32[2,64,384], index: 1, kind: input, shape index: {}]
  %s2 = inlined_call_operand.hbm [shape: f32[2,64,384], index: 2, kind: output, shape index: {}]
  %s3 = sld [smem:[#allocation0]]
  $region95: #{cbatchnorm1d.1} parent=0
    _
  %s5 = ssub.s32 1, %s3
  %s6 = scalar_select 0, %s5, %s3
  $region1: #{cbatchnorm1d.1} parent=0
    #allocation4 [shape = 'u8[131072]{0}', space=vmem, size = 0x20000, scoped, tag = 'input window, operand 1']
    #allocation5 [shape = 'u8[131072]{0}', space=vmem, size = 0x20000, scoped, tag = 'output window, operand 0']
    #allocation6 [shape = 's32[2]{0}', space=sflag, size = 0x8, scoped, tag = 'scoped memory for cbatchnorm1d.1']
    %7 = vsyncpa [#allocation6], 0
    %s8 = scalar_lea.sflag [#allocation6], 1
    %9 = vsyncpa %s8, 0
    loop: start=0, step=1, limit=8
    $region2: #{cbatchnorm1d.1} parent=1 // loop_pre_header
      _
    $region3: #{cbatchnorm1d.1} parent=1 // loop_header
      %s11 = sphi 0, %s15
      %p12 = scmp.ge.s32.totalorder %s11, 8
      %s18 = sphi 0, %s44
      %s19 = sphi 0, %s40
      %s20 = sphi 0, %s36
      %s21 = sphi 0, %s32
      %s22 = sphi 0, %s18
      %s23 = sphi 0, %s19
      %s24 = sphi 0, %s20
      %s25 = sphi 0, %s21
      %s26 = sphi 0, %s22
      %s27 = sphi 0, %s23
      %s28 = sphi 0, %s24
      %s29 = sphi 0, %s25
      %s49 = sphi 0, %s51
      %s52 = sphi 0, %s49
      %s53 = sphi 0, %s52
      %s69 = sphi 0, %s53
      %s79 = sphi 0, %s81
      %s82 = sphi 0, %s79
      %s83 = sphi 0, %s82
      %s99 = sphi 0, %s83
      %s111 = sphi 0, %s113
      %s114 = sphi 0, %s111
      %s115 = sphi 0, %s114
      %s131 = sphi 0, %s115
    $region4: #{cbatchnorm1d.1} parent=1 // loop_header_branch
      %14 = sbr.rel (%p12) target = $region8
    $region5: #{cbatchnorm1d.1} parent=1 // loop_body
      %s16 = ssub.s32 %s11, 1
      %s17 = ssub.s32 %s11, 2
      %s30 = sadd.s32 1, %s21
      %p31 = scmp.ge.s32.totalorder %s30, 3
      %s32 = scalar_select %p31, 0, %s30
      %s33 = sadd.s32 1, %s20
      %s34 = scalar_select %p31, %s33, %s20
      %p35 = scmp.ge.s32.totalorder %s34, 2
      %s36 = scalar_select %p35, 0, %s34
      %s37 = sadd.s32 1, %s19
      %s38 = scalar_select %p35, %s37, %s19
      %p39 = scmp.ge.s32.totalorder %s38, 1
      %s40 = scalar_select %p39, 0, %s38
      %s41 = sadd.s32 1, %s18
      %s42 = scalar_select %p39, %s41, %s18
      %p43 = scmp.ge.s32.totalorder %s42, 1
      %s44 = scalar_select %p43, 0, %s42
      %s45 = ssub.s32 %s18, %s44
      %s46 = ssub.s32 %s19, %s40
      %s47 = sor.u32 %s45, %s46
      %p48 = scmp.eq.s32.totalorder %s47, 0
      %s50 = sadd.s32 %s49, 1
      %s51 = scalar_select %p48, %s49, %s50
      %p54 = pneg %p48
      %p55 = scmp.eq.s32.totalorder %s11, 5
      %p56 = por %p54, %p55
      %p57 = scmp.ne.s32.totalorder %s49, %s52
      %p58 = scmp.eq.s32.totalorder %s11, 0
      %p59 = por %p57, %p58
      %p60 = scmp.ne.s32.totalorder %s49, %s52
      %p61 = scmp.eq.s32.totalorder %s16, 5
      %p62 = por %p60, %p61
      %p63 = scmp.ne.s32.totalorder %s52, %s53
      %p64 = scmp.eq.s32.totalorder %s16, 0
      %p65 = por %p63, %p64
      %p66 = scmp.ne.s32.totalorder %s52, %s53
      %p67 = scmp.eq.s32.totalorder %s17, 5
      %p68 = por %p66, %p67
      %p70 = scmp.ne.s32.totalorder %s53, %s69
      %p71 = scmp.eq.s32.totalorder %s17, 0
      %p72 = por %p70, %p71
      %s73 = ssub.s32 %s18, %s44
      %s74 = ssub.s32 %s19, %s40
      %s75 = sor.u32 %s73, %s74
      %s76 = ssub.s32 %s21, %s32
      %s77 = sor.u32 %s75, %s76
      %p78 = scmp.eq.s32.totalorder %s77, 0
      %s80 = sadd.s32 %s79, 1
      %s81 = scalar_select %p78, %s79, %s80
      %p84 = pneg %p78
      %p85 = scmp.eq.s32.totalorder %s11, 5
      %p86 = por %p84, %p85
      %p87 = scmp.ne.s32.totalorder %s79, %s82
      %p88 = scmp.eq.s32.totalorder %s11, 0
      %p89 = por %p87, %p88
      %p90 = scmp.ne.s32.totalorder %s79, %s82
      %p91 = scmp.eq.s32.totalorder %s16, 5
      %p92 = por %p90, %p91
      %p93 = scmp.ne.s32.totalorder %s82, %s83
      %p94 = scmp.eq.s32.totalorder %s16, 0
      %p95 = por %p93, %p94
      %p96 = scmp.ne.s32.totalorder %s82, %s83
      %p97 = scmp.eq.s32.totalorder %s17, 5
      %p98 = por %p96, %p97
      %p100 = scmp.ne.s32.totalorder %s83, %s99
      %p101 = scmp.eq.s32.totalorder %s17, 0
      %p102 = por %p100, %p101
      %s103 = smul.u32 %s21, %s20
      %s104 = smul.u32 %s32, %s36
      %s105 = ssub.s32 %s18, %s44
      %s106 = ssub.s32 %s19, %s40
      %s107 = sor.u32 %s105, %s106
      %s108 = ssub.s32 %s103, %s104
      %s109 = sor.u32 %s107, %s108
      %p110 = scmp.eq.s32.totalorder %s109, 0
      %s112 = sadd.s32 %s111, 1
      %s113 = scalar_select %p110, %s111, %s112
      %p116 = pneg %p110
      %p117 = scmp.eq.s32.totalorder %s11, 5
      %p118 = por %p116, %p117
      %p119 = scmp.ne.s32.totalorder %s111, %s114
      %p120 = scmp.eq.s32.totalorder %s11, 0
      %p121 = por %p119, %p120
      %p122 = scmp.ne.s32.totalorder %s111, %s114
      %p123 = scmp.eq.s32.totalorder %s16, 5
      %p124 = por %p122, %p123
      %p125 = scmp.ne.s32.totalorder %s114, %s115
      %p126 = scmp.eq.s32.totalorder %s16, 0
      %p127 = por %p125, %p126
      %p128 = scmp.ne.s32.totalorder %s114, %s115
      %p129 = scmp.eq.s32.totalorder %s17, 5
      %p130 = por %p128, %p129
      %p132 = scmp.ne.s32.totalorder %s115, %s131
      %p133 = scmp.eq.s32.totalorder %s17, 0
      %p134 = por %p132, %p133
      %p135 = scmp.le.s32.totalorder 1, %s11
      %p136 = scmp.lt.s32.totalorder %s11, 7
      %p137 = pnand %p135, %p136
      %p138 = pneg %p137
      // Predicated region
      $region9: #{cbatchnorm1d.1} parent=5 // pred_check
        _
      $region10: #{cbatchnorm1d.1} parent=5 // pred_check_branch
        %140 = sbr.rel (%p137) target = $region12
      $region11: #{cbatchnorm1d.1} parent=5 // pred_region
        %s141 = ssub.s32 %s11, 1
        // Predicated region
        $region13: #{cbatchnorm1d.1} parent=11 // pred_check
          %p142 = pneg %p65
        $region14: #{cbatchnorm1d.1} parent=11 // pred_check_branch
          %144 = sbr.rel (%p142) target = $region16
        $region15: #{cbatchnorm1d.1} parent=11 // pred_region
          %s145 = smul.u32 2, %s22
          %s146 = smul.u32 8, %s23
          %p147 = scmp.lt.s32.totalorder %s145, 1
          %s148 = scalar_select %p147, %s145, 1
          %p149 = scmp.lt.s32.totalorder %s146, 7
          %s150 = scalar_select %p149, %s146, 7
          %s151 = smul.addr %s148, 8
          %s152 = sadd.s32 %s150, %s151
          %s153 = smul.addr %s152, 8
          %s154 = scalar_lea.vmem %s0, %s153
          %s155 = smul.u32 2, %s22
          %s156 = smul.u32 8, %s23
        $region16: #{cbatchnorm1d.1} parent=11 // pred_fallthru
          _
      $region12: #{cbatchnorm1d.1} parent=5 // pred_fallthru
        _
      %p157 = scmp.lt.s32.totalorder %s11, 6
      // Predicated region
      $region17: #{cbatchnorm1d.1} parent=5 // pred_check
        %p158 = pneg %p157
      $region18: #{cbatchnorm1d.1} parent=5 // pred_check_branch
        %160 = sbr.rel (%p158) target = $region20
      $region19: #{cbatchnorm1d.1} parent=5 // pred_region
        // Predicated region
        $region21: #{cbatchnorm1d.1} parent=19 // pred_check
          %p161 = pneg %p89
        $region22: #{cbatchnorm1d.1} parent=19 // pred_check_branch
          %163 = sbr.rel (%p161) target = $region24
        $region23: #{cbatchnorm1d.1} parent=19 // pred_region
          %s164 = sand.u32 %s79, 1
          %s165 = sand.u32 %s79, 1
          %s166 = smul.addr %s165, 128
          %s167 = scalar_lea.vmem [#allocation4], %s166
          %s168 = smul.u32 2, %s18
          %s169 = smul.u32 8, %s19
          %s170 = smul.addr %s169, 3
          %s171 = sadd.s32 %s21, %s170
          %s172 = smul.addr %s168, 24
          %s173 = sadd.s32 %s171, %s172
          %s174 = smul.addr %s173, 8
          %s175 = scalar_lea.vmem %s1, %s174
          // Predicated region
          $region25: #{cbatchnorm1d.1} parent=23 // pred_check
            _
          $region26: #{cbatchnorm1d.1} parent=23 // pred_check_branch
            %177 = sbr.rel (0) target = $region28
          $region27: #{cbatchnorm1d.1} parent=23 // pred_region
            // Predicated region
            $region29: #{cbatchnorm1d.1} parent=27 // pred_check
              _
            $region30: #{cbatchnorm1d.1} parent=27 // pred_check_branch
              %179 = sbr.rel (0) target = $region32
            $region31: #{cbatchnorm1d.1} parent=27 // pred_region
              // Predicated region
              $region44: #{cbatchnorm1d.1} parent=31 // pred_check
                _
              $region45: #{cbatchnorm1d.1} parent=31 // pred_check_branch
                %224 = sbr.rel (0) target = $region47
              $region46: #{cbatchnorm1d.1} parent=31 // pred_region
                loop: start=0, step=1, limit=1
                $region48: #{cbatchnorm1d.1} parent=46 // loop_pre_header
                  _
                $region49: #{cbatchnorm1d.1} parent=46 // loop_header
                  %s226 = sphi 0, %s230
                  %p227 = scmp.ge.s32.totalorder %s226, 1
                  %s231 = sphi %s175, %s175
                  %s232 = sphi %s167, %s167
                $region50: #{cbatchnorm1d.1} parent=46 // loop_header_branch
                  %229 = sbr.rel (%p227) target = $region54
                $region51: #{cbatchnorm1d.1} parent=46 // loop_body
                  %v233 = vld [vmem:[%s231] sm:$0xff]
                  %234 = vst [vmem:[%s232] sm:$0xff] %v233
                  %v235 = vld [vmem:[%s231 + $0x18] sm:$0xff]
                  %236 = vst [vmem:[%s232 + $0x8] sm:$0xff] %v235
                  %v237 = vld [vmem:[%s231 + $0x30] sm:$0xff]
                  %238 = vst [vmem:[%s232 + $0x10] sm:$0xff] %v237
                  %v239 = vld [vmem:[%s231 + $0x48] sm:$0xff]
                  %240 = vst [vmem:[%s232 + $0x18] sm:$0xff] %v239
                  %v241 = vld [vmem:[%s231 + $0x60] sm:$0xff]
                  %242 = vst [vmem:[%s232 + $0x20] sm:$0xff] %v241
                  %v243 = vld [vmem:[%s231 + $0x78] sm:$0xff]
                  %244 = vst [vmem:[%s232 + $0x28] sm:$0xff] %v243
                  %v245 = vld [vmem:[%s231 + $0x90] sm:$0xff]
                  %246 = vst [vmem:[%s232 + $0x30] sm:$0xff] %v245
                  %v247 = vld [vmem:[%s231 + $0xa8] sm:$0xff]
                  %248 = vst [vmem:[%s232 + $0x38] sm:$0xff] %v247
                  %v249 = vld [vmem:[%s231 + $0xc0] sm:$0xff]
                  %250 = vst [vmem:[%s232 + $0x40] sm:$0xff] %v249
                  %v251 = vld [vmem:[%s231 + $0xd8] sm:$0xff]
                  %252 = vst [vmem:[%s232 + $0x48] sm:$0xff] %v251
                  %v253 = vld [vmem:[%s231 + $0xf0] sm:$0xff]
                  %254 = vst [vmem:[%s232 + $0x50] sm:$0xff] %v253
                  %v255 = vld [vmem:[%s231 + $0x108] sm:$0xff]
                  %256 = vst [vmem:[%s232 + $0x58] sm:$0xff] %v255
                  %v257 = vld [vmem:[%s231 + $0x120] sm:$0xff]
                  %258 = vst [vmem:[%s232 + $0x60] sm:$0xff] %v257
                  %v259 = vld [vmem:[%s231 + $0x138] sm:$0xff]
                  %260 = vst [vmem:[%s232 + $0x68] sm:$0xff] %v259
                  %v261 = vld [vmem:[%s231 + $0x150] sm:$0xff]
                  %262 = vst [vmem:[%s232 + $0x70] sm:$0xff] %v261
                  %v263 = vld [vmem:[%s231 + $0x168] sm:$0xff]
                  %264 = vst [vmem:[%s232 + $0x78] sm:$0xff] %v263
                $region52: #{cbatchnorm1d.1} parent=46 // loop_footer
                  %s230 = sadd.s32 1, %s226
                $region53: #{cbatchnorm1d.1} parent=46 // loop_footer_branch
                  %225 = sbr.rel target = $region49
                $region54: #{cbatchnorm1d.1} parent=46 // loop_exit
                  _
              $region47: #{cbatchnorm1d.1} parent=31 // pred_fallthru
                _
              // Predicated region
              $region55: #{cbatchnorm1d.1} parent=31 // pred_check
                _
              $region56: #{cbatchnorm1d.1} parent=31 // pred_check_branch
                %266 = sbr.rel target = $region58
              $region57: #{cbatchnorm1d.1} parent=31 // pred_region
                _
              $region58: #{cbatchnorm1d.1} parent=31 // pred_fallthru
                _
            $region32: #{cbatchnorm1d.1} parent=27 // pred_fallthru
              _
            // Predicated region
            $region33: #{cbatchnorm1d.1} parent=27 // pred_check
              _
            $region34: #{cbatchnorm1d.1} parent=27 // pred_check_branch
              %181 = sbr.rel target = $region36
            $region35: #{cbatchnorm1d.1} parent=27 // pred_region
              loop: start=0, step=1, limit=1
              $region37: #{cbatchnorm1d.1} parent=35 // loop_pre_header
                _
              $region38: #{cbatchnorm1d.1} parent=35 // loop_header
                %s184 = sphi 0, %s188
                %p185 = scmp.ge.s32.totalorder %s184, 1
                %s189 = sphi %s175, %s175
                %s190 = sphi %s167, %s167
              $region39: #{cbatchnorm1d.1} parent=35 // loop_header_branch
                %187 = sbr.rel (%p185) target = $region43
              $region40: #{cbatchnorm1d.1} parent=35 // loop_body
                %v191 = vld [vmem:[%s189] sm:$0xff]
                %192 = vst [vmem:[%s190] sm:$0xff] %v191
                %v193 = vld [vmem:[%s189 + $0x18] sm:$0xff]
                %194 = vst [vmem:[%s190 + $0x8] sm:$0xff] %v193
                %v195 = vld [vmem:[%s189 + $0x30] sm:$0xff]
                %196 = vst [vmem:[%s190 + $0x10] sm:$0xff] %v195
                %v197 = vld [vmem:[%s189 + $0x48] sm:$0xff]
                %198 = vst [vmem:[%s190 + $0x18] sm:$0xff] %v197
                %v199 = vld [vmem:[%s189 + $0x60] sm:$0xff]
                %200 = vst [vmem:[%s190 + $0x20] sm:$0xff] %v199
                %v201 = vld [vmem:[%s189 + $0x78] sm:$0xff]
                %202 = vst [vmem:[%s190 + $0x28] sm:$0xff] %v201
                %v203 = vld [vmem:[%s189 + $0x90] sm:$0xff]
                %204 = vst [vmem:[%s190 + $0x30] sm:$0xff] %v203
                %v205 = vld [vmem:[%s189 + $0xa8] sm:$0xff]
                %206 = vst [vmem:[%s190 + $0x38] sm:$0xff] %v205
                %v207 = vld [vmem:[%s189 + $0xc0] sm:$0xff]
                %208 = vst [vmem:[%s190 + $0x40] sm:$0xff] %v207
                %v209 = vld [vmem:[%s189 + $0xd8] sm:$0xff]
                %210 = vst [vmem:[%s190 + $0x48] sm:$0xff] %v209
                %v211 = vld [vmem:[%s189 + $0xf0] sm:$0xff]
                %212 = vst [vmem:[%s190 + $0x50] sm:$0xff] %v211
                %v213 = vld [vmem:[%s189 + $0x108] sm:$0xff]
                %214 = vst [vmem:[%s190 + $0x58] sm:$0xff] %v213
                %v215 = vld [vmem:[%s189 + $0x120] sm:$0xff]
                %216 = vst [vmem:[%s190 + $0x60] sm:$0xff] %v215
                %v217 = vld [vmem:[%s189 + $0x138] sm:$0xff]
                %218 = vst [vmem:[%s190 + $0x68] sm:$0xff] %v217
                %v219 = vld [vmem:[%s189 + $0x150] sm:$0xff]
                %220 = vst [vmem:[%s190 + $0x70] sm:$0xff] %v219
                %v221 = vld [vmem:[%s189 + $0x168] sm:$0xff]
                %222 = vst [vmem:[%s190 + $0x78] sm:$0xff] %v221
              $region41: #{cbatchnorm1d.1} parent=35 // loop_footer
                %s188 = sadd.s32 1, %s184
              $region42: #{cbatchnorm1d.1} parent=35 // loop_footer_branch
                %183 = sbr.rel target = $region38
              $region43: #{cbatchnorm1d.1} parent=35 // loop_exit
                _
            $region36: #{cbatchnorm1d.1} parent=27 // pred_fallthru
              _
          $region28: #{cbatchnorm1d.1} parent=23 // pred_fallthru
            _
          %267 = vnop
        $region24: #{cbatchnorm1d.1} parent=19 // pred_fallthru
          _
      $region20: #{cbatchnorm1d.1} parent=5 // pred_fallthru
        _
      %p268 = scmp.le.s32.totalorder 1, %s11
      %p269 = scmp.lt.s32.totalorder %s11, 7
      %p270 = pnand %p268, %p269
      %p271 = pneg %p270
      // Predicated region
      $region59: #{cbatchnorm1d.1} parent=5 // pred_check
        _
      $region60: #{cbatchnorm1d.1} parent=5 // pred_check_branch
        %273 = sbr.rel (%p270) target = $region62
      $region61: #{cbatchnorm1d.1} parent=5 // pred_region
        %s274 = ssub.s32 %s11, 1
        %s275 = sand.u32 %s82, 1
        %s276 = sand.u32 %s82, 1
        %s277 = smul.addr %s276, 128
        %s278 = scalar_lea.vmem [#allocation4], %s277
        // Predicated region
        $region63: #{cbatchnorm1d.1} parent=61 // pred_check
          %p279 = pneg %p95
        $region64: #{cbatchnorm1d.1} parent=61 // pred_check_branch
          %281 = sbr.rel (%p279) target = $region66
        $region65: #{cbatchnorm1d.1} parent=61 // pred_region
          _
        $region66: #{cbatchnorm1d.1} parent=61 // pred_fallthru
          _
        %s282 = smul.u32 2, %s22
        %s283 = smul.u32 8, %s23
        %p284 = scmp.lt.s32.totalorder %s282, 1
        %s285 = scalar_select %p284, %s282, 1
        %p286 = scmp.lt.s32.totalorder %s283, 7
        %s287 = scalar_select %p286, %s283, 7
        %s288 = smul.addr %s285, 8
        %s289 = sadd.s32 %s287, %s288
        %s290 = smul.addr %s289, 8
        %s291 = scalar_lea.vmem %s0, %s290
        %p292 = pneg %p65
        %p293 = pneg %p62
        %s294 = sand.u32 %s82, 1
        %s295 = sand.u32 %s82, 1
        %s296 = smul.addr %s295, 128
        %s297 = scalar_lea.vmem [#allocation4], %s296
        %p298 = pneg %p95
        %p299 = pneg %p92
        %p300 = pneg %p127
        %p301 = pneg %p124
        %s302 = sand.u32 %s114, 1
        %s303 = scalar_lea.sflag [#allocation6], %s302
        %s304 = sand.u32 %s114, 1
        %s305 = smul.addr %s304, 128
        %s306 = scalar_lea.vmem [#allocation5], %s305
        %s307 = smul.u32 2, %s22
        %s308 = smul.u32 8, %s23
        %p309 = scmp.lt.s32.totalorder %s307, 1
        %s310 = scalar_select %p309, %s307, 1
        %p311 = scmp.lt.s32.totalorder %s308, 7
        %s312 = scalar_select %p311, %s308, 7
        %s313 = smul.addr %s310, 8
        %s314 = sadd.s32 %s312, %s313
        %s315 = smul.addr %s314, 8
        %s316 = scalar_lea.vmem %s0, %s315
        %s317 = smul.u32 2, %s22
        %s318 = smul.u32 8, %s23
        %s319 = smul.u32 2, %s22
        %s320 = smul.u32 8, %s23
        %s321 = smul.u32 %s25, %s24
        %s322 = smul.u32 2, %s22
        %s323 = smul.u32 8, %s23
        %p324 = scmp.eq.s32.totalorder %s24, 0
        // Predicated region
        $region67: #{cbatchnorm1d.1} parent=61 // pred_check
          %p325 = pneg %p324
        $region68: #{cbatchnorm1d.1} parent=61 // pred_check_branch
          %327 = sbr.rel (%p325) target = $region70
        $region69: #{cbatchnorm1d.1} parent=61 // pred_region
          %p328 = scmp.eq.s32.totalorder %s25, 0
          // Predicated region
          $region71: #{cbatchnorm1d.1} parent=69 // pred_check
            %p329 = pneg %p328
          $region72: #{cbatchnorm1d.1} parent=69 // pred_check_branch
            %331 = sbr.rel (%p329) target = $region74
          $region73: #{cbatchnorm1d.1} parent=69 // pred_region
            %vm332 = vcmask 7168
            %333 = vst.msk [vmem:[#allocation2] sm:$0xff] %vm332, 0.0
            %334 = vst.msk [vmem:[#allocation2 + $0x8] sm:$0xff] %vm332, 0.0
            %335 = vst.msk [vmem:[#allocation2 + $0x10] sm:$0xff] %vm332, 0.0
            %336 = vst.msk [vmem:[#allocation2 + $0x18] sm:$0xff] %vm332, 0.0
            %337 = vst.msk [vmem:[#allocation2 + $0x20] sm:$0xff] %vm332, 0.0
            %338 = vst.msk [vmem:[#allocation2 + $0x28] sm:$0xff] %vm332, 0.0
            %339 = vst.msk [vmem:[#allocation2 + $0x30] sm:$0xff] %vm332, 0.0
            %340 = vst.msk [vmem:[#allocation2 + $0x38] sm:$0xff] %vm332, 0.0
            %341 = vst.msk [vmem:[#allocation2 + $0x40] sm:$0xff] %vm332, 0.0
            %342 = vst.msk [vmem:[#allocation2 + $0x48] sm:$0xff] %vm332, 0.0
            %343 = vst.msk [vmem:[#allocation2 + $0x50] sm:$0xff] %vm332, 0.0
            %344 = vst.msk [vmem:[#allocation2 + $0x58] sm:$0xff] %vm332, 0.0
            %345 = vst.msk [vmem:[#allocation2 + $0x60] sm:$0xff] %vm332, 0.0
            %346 = vst.msk [vmem:[#allocation2 + $0x68] sm:$0xff] %vm332, 0.0
            %347 = vst.msk [vmem:[#allocation2 + $0x70] sm:$0xff] %vm332, 0.0
            %348 = vst.msk [vmem:[#allocation2 + $0x78] sm:$0xff] %vm332, 0.0
            %349 = vst.msk [vmem:[#allocation3] sm:$0xff] %vm332, 0.0
            %350 = vst.msk [vmem:[#allocation3 + $0x8] sm:$0xff] %vm332, 0.0
            %351 = vst.msk [vmem:[#allocation3 + $0x10] sm:$0xff] %vm332, 0.0
            %352 = vst.msk [vmem:[#allocation3 + $0x18] sm:$0xff] %vm332, 0.0
            %353 = vst.msk [vmem:[#allocation3 + $0x20] sm:$0xff] %vm332, 0.0
            %354 = vst.msk [vmem:[#allocation3 + $0x28] sm:$0xff] %vm332, 0.0
            %355 = vst.msk [vmem:[#allocation3 + $0x30] sm:$0xff] %vm332, 0.0
            %356 = vst.msk [vmem:[#allocation3 + $0x38] sm:$0xff] %vm332, 0.0
            %357 = vst.msk [vmem:[#allocation3 + $0x40] sm:$0xff] %vm332, 0.0
            %358 = vst.msk [vmem:[#allocation3 + $0x48] sm:$0xff] %vm332, 0.0
            %359 = vst.msk [vmem:[#allocation3 + $0x50] sm:$0xff] %vm332, 0.0
            %360 = vst.msk [vmem:[#allocation3 + $0x58] sm:$0xff] %vm332, 0.0
            %361 = vst.msk [vmem:[#allocation3 + $0x60] sm:$0xff] %vm332, 0.0
            %362 = vst.msk [vmem:[#allocation3 + $0x68] sm:$0xff] %vm332, 0.0
            %363 = vst.msk [vmem:[#allocation3 + $0x70] sm:$0xff] %vm332, 0.0
            %364 = vst.msk [vmem:[#allocation3 + $0x78] sm:$0xff] %vm332, 0.0
          $region74: #{cbatchnorm1d.1} parent=69 // pred_fallthru
            _
          %v365 = vld [vmem:[#allocation2] sm:$0xff]
          %v366 = vld [vmem:[#allocation2 + $0x8] sm:$0xff]
          %v367 = vld [vmem:[#allocation2 + $0x10] sm:$0xff]
          %v368 = vld [vmem:[#allocation2 + $0x18] sm:$0xff]
          %v369 = vld [vmem:[#allocation2 + $0x20] sm:$0xff]
          %v370 = vld [vmem:[#allocation2 + $0x28] sm:$0xff]
          %v371 = vld [vmem:[#allocation2 + $0x30] sm:$0xff]
          %v372 = vld [vmem:[#allocation2 + $0x38] sm:$0xff]
          %v373 = vld [vmem:[#allocation2 + $0x40] sm:$0xff]
          %v374 = vld [vmem:[#allocation2 + $0x48] sm:$0xff]
          %v375 = vld [vmem:[#allocation2 + $0x50] sm:$0xff]
          %v376 = vld [vmem:[#allocation2 + $0x58] sm:$0xff]
          %v377 = vld [vmem:[#allocation2 + $0x60] sm:$0xff]
          %v378 = vld [vmem:[#allocation2 + $0x68] sm:$0xff]
          %v379 = vld [vmem:[#allocation2 + $0x70] sm:$0xff]
          %v380 = vld [vmem:[#allocation2 + $0x78] sm:$0xff]
          %v381 = vld [vmem:[%s278] sm:$0xff]
          %v382 = vld [vmem:[%s278 + $0x8] sm:$0xff]
          %v383 = vld [vmem:[%s278 + $0x10] sm:$0xff]
          %v384 = vld [vmem:[%s278 + $0x18] sm:$0xff]
          %v385 = vld [vmem:[%s278 + $0x20] sm:$0xff]
          %v386 = vld [vmem:[%s278 + $0x28] sm:$0xff]
          %v387 = vld [vmem:[%s278 + $0x30] sm:$0xff]
          %v388 = vld [vmem:[%s278 + $0x38] sm:$0xff]
          %v389 = vld [vmem:[%s278 + $0x40] sm:$0xff]
          %v390 = vld [vmem:[%s278 + $0x48] sm:$0xff]
          %v391 = vld [vmem:[%s278 + $0x50] sm:$0xff]
          %v392 = vld [vmem:[%s278 + $0x58] sm:$0xff]
          %v393 = vld [vmem:[%s278 + $0x60] sm:$0xff]
          %v394 = vld [vmem:[%s278 + $0x68] sm:$0xff]
          %v395 = vld [vmem:[%s278 + $0x70] sm:$0xff]
          %v396 = vld [vmem:[%s278 + $0x78] sm:$0xff]
          %397 = vadd.xlane.f32.xlu0 %v381
          %v398 = vpop.xlane.xlu0 %397
          %399 = vadd.xlane.f32.xlu0 %v382
          %v400 = vpop.xlane.xlu0 %399
          %401 = vadd.xlane.f32.xlu0 %v383
          %v402 = vpop.xlane.xlu0 %401
          %403 = vadd.xlane.f32.xlu0 %v384
          %v404 = vpop.xlane.xlu0 %403
          %405 = vadd.xlane.f32.xlu0 %v385
          %v406 = vpop.xlane.xlu0 %405
          %407 = vadd.xlane.f32.xlu0 %v386
          %v408 = vpop.xlane.xlu0 %407
          %409 = vadd.xlane.f32.xlu0 %v387
          %v410 = vpop.xlane.xlu0 %409
          %411 = vadd.xlane.f32.xlu0 %v388
          %v412 = vpop.xlane.xlu0 %411
          %413 = vadd.xlane.f32.xlu0 %v389
          %v414 = vpop.xlane.xlu0 %413
          %415 = vadd.xlane.f32.xlu0 %v390
          %v416 = vpop.xlane.xlu0 %415
          %417 = vadd.xlane.f32.xlu0 %v391
          %v418 = vpop.xlane.xlu0 %417
          %419 = vadd.xlane.f32.xlu0 %v392
          %v420 = vpop.xlane.xlu0 %419
          %421 = vadd.xlane.f32.xlu0 %v393
          %v422 = vpop.xlane.xlu0 %421
          %423 = vadd.xlane.f32.xlu0 %v394
          %v424 = vpop.xlane.xlu0 %423
          %425 = vadd.xlane.f32.xlu0 %v395
          %v426 = vpop.xlane.xlu0 %425
          %427 = vadd.xlane.f32.xlu0 %v396
          %v428 = vpop.xlane.xlu0 %427
          %v429 = vadd.f32 %v365, %v398
          %v430 = vadd.f32 %v366, %v400
          %v431 = vadd.f32 %v367, %v402
          %v432 = vadd.f32 %v368, %v404
          %v433 = vadd.f32 %v369, %v406
          %v434 = vadd.f32 %v370, %v408
          %v435 = vadd.f32 %v371, %v410
          %v436 = vadd.f32 %v372, %v412
          %v437 = vadd.f32 %v373, %v414
          %v438 = vadd.f32 %v374, %v416
          %v439 = vadd.f32 %v375, %v418
          %v440 = vadd.f32 %v376, %v420
          %v441 = vadd.f32 %v377, %v422
          %v442 = vadd.f32 %v378, %v424
          %v443 = vadd.f32 %v379, %v426
          %v444 = vadd.f32 %v380, %v428
          %vm445 = vcmask 7168
          %446 = vst.msk [vmem:[#allocation2] sm:$0xff] %vm445, %v429
          %447 = vst.msk [vmem:[#allocation2 + $0x8] sm:$0xff] %vm445, %v430
          %448 = vst.msk [vmem:[#allocation2 + $0x10] sm:$0xff] %vm445, %v431
          %449 = vst.msk [vmem:[#allocation2 + $0x18] sm:$0xff] %vm445, %v432
          %450 = vst.msk [vmem:[#allocation2 + $0x20] sm:$0xff] %vm445, %v433
          %451 = vst.msk [vmem:[#allocation2 + $0x28] sm:$0xff] %vm445, %v434
          %452 = vst.msk [vmem:[#allocation2 + $0x30] sm:$0xff] %vm445, %v435
          %453 = vst.msk [vmem:[#allocation2 + $0x38] sm:$0xff] %vm445, %v436
          %454 = vst.msk [vmem:[#allocation2 + $0x40] sm:$0xff] %vm445, %v437
          %455 = vst.msk [vmem:[#allocation2 + $0x48] sm:$0xff] %vm445, %v438
          %456 = vst.msk [vmem:[#allocation2 + $0x50] sm:$0xff] %vm445, %v439
          %457 = vst.msk [vmem:[#allocation2 + $0x58] sm:$0xff] %vm445, %v440
          %458 = vst.msk [vmem:[#allocation2 + $0x60] sm:$0xff] %vm445, %v441
          %459 = vst.msk [vmem:[#allocation2 + $0x68] sm:$0xff] %vm445, %v442
          %460 = vst.msk [vmem:[#allocation2 + $0x70] sm:$0xff] %vm445, %v443
          %461 = vst.msk [vmem:[#allocation2 + $0x78] sm:$0xff] %vm445, %v444
          %v462 = vld [vmem:[%s278] sm:$0xff]
          %v463 = vld [vmem:[%s278 + $0x8] sm:$0xff]
          %v464 = vld [vmem:[%s278 + $0x10] sm:$0xff]
          %v465 = vld [vmem:[%s278 + $0x18] sm:$0xff]
          %v466 = vld [vmem:[%s278 + $0x20] sm:$0xff]
          %v467 = vld [vmem:[%s278 + $0x28] sm:$0xff]
          %v468 = vld [vmem:[%s278 + $0x30] sm:$0xff]
          %v469 = vld [vmem:[%s278 + $0x38] sm:$0xff]
          %v470 = vld [vmem:[%s278 + $0x40] sm:$0xff]
          %v471 = vld [vmem:[%s278 + $0x48] sm:$0xff]
          %v472 = vld [vmem:[%s278 + $0x50] sm:$0xff]
          %v473 = vld [vmem:[%s278 + $0x58] sm:$0xff]
          %v474 = vld [vmem:[%s278 + $0x60] sm:$0xff]
          %v475 = vld [vmem:[%s278 + $0x68] sm:$0xff]
          %v476 = vld [vmem:[%s278 + $0x70] sm:$0xff]
          %v477 = vld [vmem:[%s278 + $0x78] sm:$0xff]
          %v478 = vld [vmem:[#allocation3] sm:$0xff]
          %v479 = vld [vmem:[#allocation3 + $0x8] sm:$0xff]
          %v480 = vld [vmem:[#allocation3 + $0x10] sm:$0xff]
          %v481 = vld [vmem:[#allocation3 + $0x18] sm:$0xff]
          %v482 = vld [vmem:[#allocation3 + $0x20] sm:$0xff]
          %v483 = vld [vmem:[#allocation3 + $0x28] sm:$0xff]
          %v484 = vld [vmem:[#allocation3 + $0x30] sm:$0xff]
          %v485 = vld [vmem:[#allocation3 + $0x38] sm:$0xff]
          %v486 = vld [vmem:[#allocation3 + $0x40] sm:$0xff]
          %v487 = vld [vmem:[#allocation3 + $0x48] sm:$0xff]
          %v488 = vld [vmem:[#allocation3 + $0x50] sm:$0xff]
          %v489 = vld [vmem:[#allocation3 + $0x58] sm:$0xff]
          %v490 = vld [vmem:[#allocation3 + $0x60] sm:$0xff]
          %v491 = vld [vmem:[#allocation3 + $0x68] sm:$0xff]
          %v492 = vld [vmem:[#allocation3 + $0x70] sm:$0xff]
          %v493 = vld [vmem:[#allocation3 + $0x78] sm:$0xff]
          %v494 = vmul.f32 %v462, %v462
          %v495 = vmul.f32 %v463, %v463
          %v496 = vmul.f32 %v464, %v464
          %v497 = vmul.f32 %v465, %v465
          %v498 = vmul.f32 %v466, %v466
          %v499 = vmul.f32 %v467, %v467
          %v500 = vmul.f32 %v468, %v468
          %v501 = vmul.f32 %v469, %v469
          %v502 = vmul.f32 %v470, %v470
          %v503 = vmul.f32 %v471, %v471
          %v504 = vmul.f32 %v472, %v472
          %v505 = vmul.f32 %v473, %v473
          %v506 = vmul.f32 %v474, %v474
          %v507 = vmul.f32 %v475, %v475
          %v508 = vmul.f32 %v476, %v476
          %v509 = vmul.f32 %v477, %v477
          %510 = vadd.xlane.f32.xlu0 %v494
          %v511 = vpop.xlane.xlu0 %510
          %512 = vadd.xlane.f32.xlu0 %v495
          %v513 = vpop.xlane.xlu0 %512
          %514 = vadd.xlane.f32.xlu0 %v496
          %v515 = vpop.xlane.xlu0 %514
          %516 = vadd.xlane.f32.xlu0 %v497
          %v517 = vpop.xlane.xlu0 %516
          %518 = vadd.xlane.f32.xlu0 %v498
          %v519 = vpop.xlane.xlu0 %518
          %520 = vadd.xlane.f32.xlu0 %v499
          %v521 = vpop.xlane.xlu0 %520
          %522 = vadd.xlane.f32.xlu0 %v500
          %v523 = vpop.xlane.xlu0 %522
          %524 = vadd.xlane.f32.xlu0 %v501
          %v525 = vpop.xlane.xlu0 %524
          %526 = vadd.xlane.f32.xlu0 %v502
          %v527 = vpop.xlane.xlu0 %526
          %528 = vadd.xlane.f32.xlu0 %v503
          %v529 = vpop.xlane.xlu0 %528
          %530 = vadd.xlane.f32.xlu0 %v504
          %v531 = vpop.xlane.xlu0 %530
          %532 = vadd.xlane.f32.xlu0 %v505
          %v533 = vpop.xlane.xlu0 %532
          %534 = vadd.xlane.f32.xlu0 %v506
          %v535 = vpop.xlane.xlu0 %534
          %536 = vadd.xlane.f32.xlu0 %v507
          %v537 = vpop.xlane.xlu0 %536
          %538 = vadd.xlane.f32.xlu0 %v508
          %v539 = vpop.xlane.xlu0 %538
          %540 = vadd.xlane.f32.xlu0 %v509
          %v541 = vpop.xlane.xlu0 %540
          %v542 = vadd.f32 %v478, %v511
          %v543 = vadd.f32 %v479, %v513
          %v544 = vadd.f32 %v480, %v515
          %v545 = vadd.f32 %v481, %v517
          %v546 = vadd.f32 %v482, %v519
          %v547 = vadd.f32 %v483, %v521
          %v548 = vadd.f32 %v484, %v523
          %v549 = vadd.f32 %v485, %v525
          %v550 = vadd.f32 %v486, %v527
          %v551 = vadd.f32 %v487, %v529
          %v552 = vadd.f32 %v488, %v531
          %v553 = vadd.f32 %v489, %v533
          %v554 = vadd.f32 %v490, %v535
          %v555 = vadd.f32 %v491, %v537
          %v556 = vadd.f32 %v492, %v539
          %v557 = vadd.f32 %v493, %v541
          %558 = vst.msk [vmem:[#allocation3] sm:$0xff] %vm445, %v542
          %559 = vst.msk [vmem:[#allocation3 + $0x8] sm:$0xff] %vm445, %v543
          %560 = vst.msk [vmem:[#allocation3 + $0x10] sm:$0xff] %vm445, %v544
          %561 = vst.msk [vmem:[#allocation3 + $0x18] sm:$0xff] %vm445, %v545
          %562 = vst.msk [vmem:[#allocation3 + $0x20] sm:$0xff] %vm445, %v546
          %563 = vst.msk [vmem:[#allocation3 + $0x28] sm:$0xff] %vm445, %v547
          %564 = vst.msk [vmem:[#allocation3 + $0x30] sm:$0xff] %vm445, %v548
          %565 = vst.msk [vmem:[#allocation3 + $0x38] sm:$0xff] %vm445, %v549
          %566 = vst.msk [vmem:[#allocation3 + $0x40] sm:$0xff] %vm445, %v550
          %567 = vst.msk [vmem:[#allocation3 + $0x48] sm:$0xff] %vm445, %v551
          %568 = vst.msk [vmem:[#allocation3 + $0x50] sm:$0xff] %vm445, %v552
          %569 = vst.msk [vmem:[#allocation3 + $0x58] sm:$0xff] %vm445, %v553
          %570 = vst.msk [vmem:[#allocation3 + $0x60] sm:$0xff] %vm445, %v554
          %571 = vst.msk [vmem:[#allocation3 + $0x68] sm:$0xff] %vm445, %v555
          %572 = vst.msk [vmem:[#allocation3 + $0x70] sm:$0xff] %vm445, %v556
          %573 = vst.msk [vmem:[#allocation3 + $0x78] sm:$0xff] %vm445, %v557
        $region70: #{cbatchnorm1d.1} parent=61 // pred_fallthru
          _
        %p574 = scmp.eq.s32.totalorder %s24, 1
        %p575 = scmp.eq.s32.totalorder %s25, 0
        %p576 = pnand %p574, %p575
        %p577 = pneg %p576
        // Predicated region
        $region75: #{cbatchnorm1d.1} parent=61 // pred_check
          _
        $region76: #{cbatchnorm1d.1} parent=61 // pred_check_branch
          %579 = sbr.rel (%p576) target = $region78
        $region77: #{cbatchnorm1d.1} parent=61 // pred_region
          %v580 = vld [vmem:[#allocation2] sm:$0xff]
          %v581 = vld [vmem:[#allocation2 + $0x8] sm:$0xff]
          %v582 = vld [vmem:[#allocation2 + $0x10] sm:$0xff]
          %v583 = vld [vmem:[#allocation2 + $0x18] sm:$0xff]
          %v584 = vld [vmem:[#allocation2 + $0x20] sm:$0xff]
          %v585 = vld [vmem:[#allocation2 + $0x28] sm:$0xff]
          %v586 = vld [vmem:[#allocation2 + $0x30] sm:$0xff]
          %v587 = vld [vmem:[#allocation2 + $0x38] sm:$0xff]
          %v588 = vld [vmem:[#allocation2 + $0x40] sm:$0xff]
          %v589 = vld [vmem:[#allocation2 + $0x48] sm:$0xff]
          %v590 = vld [vmem:[#allocation2 + $0x50] sm:$0xff]
          %v591 = vld [vmem:[#allocation2 + $0x58] sm:$0xff]
          %v592 = vld [vmem:[#allocation2 + $0x60] sm:$0xff]
          %v593 = vld [vmem:[#allocation2 + $0x68] sm:$0xff]
          %v594 = vld [vmem:[#allocation2 + $0x70] sm:$0xff]
          %v595 = vld [vmem:[#allocation2 + $0x78] sm:$0xff]
          %v596 = vld [vmem:[#allocation3] sm:$0xff]
          %v597 = vld [vmem:[#allocation3 + $0x8] sm:$0xff]
          %v598 = vld [vmem:[#allocation3 + $0x10] sm:$0xff]
          %v599 = vld [vmem:[#allocation3 + $0x18] sm:$0xff]
          %v600 = vld [vmem:[#allocation3 + $0x20] sm:$0xff]
          %v601 = vld [vmem:[#allocation3 + $0x28] sm:$0xff]
          %v602 = vld [vmem:[#allocation3 + $0x30] sm:$0xff]
          %v603 = vld [vmem:[#allocation3 + $0x38] sm:$0xff]
          %v604 = vld [vmem:[#allocation3 + $0x40] sm:$0xff]
          %v605 = vld [vmem:[#allocation3 + $0x48] sm:$0xff]
          %v606 = vld [vmem:[#allocation3 + $0x50] sm:$0xff]
          %v607 = vld [vmem:[#allocation3 + $0x58] sm:$0xff]
          %v608 = vld [vmem:[#allocation3 + $0x60] sm:$0xff]
          %v609 = vld [vmem:[#allocation3 + $0x68] sm:$0xff]
          %v610 = vld [vmem:[#allocation3 + $0x70] sm:$0xff]
          %v611 = vld [vmem:[#allocation3 + $0x78] sm:$0xff]
          %v612 = vld [vmem:[%s316] sm:$0xff]
          %v613 = vld [vmem:[%s316 + $0x8] sm:$0xff]
          %v614 = vld [vmem:[%s316 + $0x10] sm:$0xff]
          %v615 = vld [vmem:[%s316 + $0x18] sm:$0xff]
          %v616 = vld [vmem:[%s316 + $0x20] sm:$0xff]
          %v617 = vld [vmem:[%s316 + $0x28] sm:$0xff]
          %v618 = vld [vmem:[%s316 + $0x30] sm:$0xff]
          %v619 = vld [vmem:[%s316 + $0x38] sm:$0xff]
          %v620 = vld [vmem:[%s316 + $0x40] sm:$0xff]
          %v621 = vld [vmem:[%s316 + $0x48] sm:$0xff]
          %v622 = vld [vmem:[%s316 + $0x50] sm:$0xff]
          %v623 = vld [vmem:[%s316 + $0x58] sm:$0xff]
          %v624 = vld [vmem:[%s316 + $0x60] sm:$0xff]
          %v625 = vld [vmem:[%s316 + $0x68] sm:$0xff]
          %v626 = vld [vmem:[%s316 + $0x70] sm:$0xff]
          %v627 = vld [vmem:[%s316 + $0x78] sm:$0xff]
          %vm628 = vcmask 7168
          %v629 = vsel %vm628, %v580, 0.0
          %v630 = vrot.slane %v629, 4
          %v631 = vadd.f32 %v629, %v630
          %v632 = vrot.slane %v631, 2
          %v633 = vadd.f32 %v631, %v632
          %v634 = vrot.slane %v633, 1
          %v635 = vadd.f32 %v633, %v634
          %v636 = vsel %vm628, %v588, 0.0
          %v637 = vrot.slane %v636, 4
          %v638 = vadd.f32 %v636, %v637
          %v639 = vrot.slane %v638, 2
          %v640 = vadd.f32 %v638, %v639
          %v641 = vrot.slane %v640, 1
          %v642 = vadd.f32 %v640, %v641
          %v643 = vsel %vm628, %v596, 0.0
          %v644 = vrot.slane %v643, 4
          %v645 = vadd.f32 %v643, %v644
          %v646 = vrot.slane %v645, 2
          %v647 = vadd.f32 %v645, %v646
          %v648 = vrot.slane %v647, 1
          %v649 = vadd.f32 %v647, %v648
          %v650 = vsel %vm628, %v604, 0.0
          %v651 = vrot.slane %v650, 4
          %v652 = vadd.f32 %v650, %v651
          %v653 = vrot.slane %v652, 2
          %v654 = vadd.f32 %v652, %v653
          %v655 = vrot.slane %v654, 1
          %v656 = vadd.f32 %v654, %v655
          %v657 = vmul.f32 %v635, 0.00032552084
          %v658 = vmul.f32 %v642, 0.00032552084
          %v659 = vmul.f32 %v649, 0.00032552084
          %v660 = vmul.f32 %v656, 0.00032552084
          %v661 = vmul.f32 %v657, %v657
          %v662 = vmul.f32 %v658, %v658
          %v663 = vsub.f32 %v659, %v661
          %v664 = vsub.f32 %v660, %v662
          %v665 = vmax.f32 %v663, 0.0
          %v666 = vmax.f32 %v664, 0.0
          %v667 = vadd.f32 %v665, 1e-05
          %v668 = vadd.f32 %v666, 1e-05
          %v669 = vrsqrt.pop %v667
          %v670 = vrsqrt.pop %v668
          %v671 = vmul.f32 %v612, %v669
          %v672 = vmul.f32 %v620, %v670
          %673 = vst.msk [vmem:[#allocation2] sm:$0xff] %vm628, %v671
          %674 = vst.msk [vmem:[#allocation2 + $0x40] sm:$0xff] %vm628, %v672
          %v675 = vmul.f32 %v671, %v657
          %v676 = vmul.f32 %v672, %v658
          %679 = vrot.lane.b32.xlu0 %v675, 1
          %v680 = vpop.permute.xlu0 %679
          %681 = vrot.lane.b32.xlu0 %v676, 1
          %v682 = vpop.permute.xlu0 %681
          %v685 = vsub.f32 %v612, %v680
          %v686 = vsub.f32 %v620, %v682
          %689 = vrot.lane.b32.xlu0 %v685, 127
          %v690 = vpop.permute.xlu0 %689
          %691 = vrot.lane.b32.xlu0 %v686, 127
          %v692 = vpop.permute.xlu0 %691
          %695 = vst.msk [vmem:[#allocation3] sm:$0xff] %vm628, %v690
          %696 = vst.msk [vmem:[#allocation3 + $0x40] sm:$0xff] %vm628, %v692
          %v697 = vsel %vm628, %v581, 0.0
          %v698 = vrot.slane %v697, 4
          %v699 = vadd.f32 %v697, %v698
          %v700 = vrot.slane %v699, 2
          %v701 = vadd.f32 %v699, %v700
          %v702 = vrot.slane %v701, 1
          %v703 = vadd.f32 %v701, %v702
          %v704 = vsel %vm628, %v589, 0.0
          %v705 = vrot.slane %v704, 4
          %v706 = vadd.f32 %v704, %v705
          %v707 = vrot.slane %v706, 2
          %v708 = vadd.f32 %v706, %v707
          %v709 = vrot.slane %v708, 1
          %v710 = vadd.f32 %v708, %v709
          %v711 = vsel %vm628, %v597, 0.0
          %v712 = vrot.slane %v711, 4
          %v713 = vadd.f32 %v711, %v712
          %v714 = vrot.slane %v713, 2
          %v715 = vadd.f32 %v713, %v714
          %v716 = vrot.slane %v715, 1
          %v717 = vadd.f32 %v715, %v716
          %v718 = vsel %vm628, %v605, 0.0
          %v719 = vrot.slane %v718, 4
          %v720 = vadd.f32 %v718, %v719
          %v721 = vrot.slane %v720, 2
          %v722 = vadd.f32 %v720, %v721
          %v723 = vrot.slane %v722, 1
          %v724 = vadd.f32 %v722, %v723
          %v725 = vmul.f32 %v703, 0.00032552084
          %v726 = vmul.f32 %v710, 0.00032552084
          %v727 = vmul.f32 %v717, 0.00032552084
          %v728 = vmul.f32 %v724, 0.00032552084
          %v729 = vmul.f32 %v725, %v725
          %v730 = vmul.f32 %v726, %v726
          %v731 = vsub.f32 %v727, %v729
          %v732 = vsub.f32 %v728, %v730
          %v733 = vmax.f32 %v731, 0.0
          %v734 = vmax.f32 %v732, 0.0
          %v735 = vadd.f32 %v733, 1e-05
          %v736 = vadd.f32 %v734, 1e-05
          %v737 = vrsqrt.pop %v735
          %v738 = vrsqrt.pop %v736
          %v739 = vmul.f32 %v613, %v737
          %v740 = vmul.f32 %v621, %v738
          %741 = vst.msk [vmem:[#allocation2 + $0x8] sm:$0xff] %vm628, %v739
          %742 = vst.msk [vmem:[#allocation2 + $0x48] sm:$0xff] %vm628, %v740
          %v743 = vmul.f32 %v739, %v725
          %v744 = vmul.f32 %v740, %v726
          %747 = vrot.lane.b32.xlu0 %v743, 1
          %v748 = vpop.permute.xlu0 %747
          %749 = vrot.lane.b32.xlu0 %v744, 1
          %v750 = vpop.permute.xlu0 %749
          %v753 = vsub.f32 %v613, %v748
          %v754 = vsub.f32 %v621, %v750
          %757 = vrot.lane.b32.xlu0 %v753, 127
          %v758 = vpop.permute.xlu0 %757
          %759 = vrot.lane.b32.xlu0 %v754, 127
          %v760 = vpop.permute.xlu0 %759
          %763 = vst.msk [vmem:[#allocation3 + $0x8] sm:$0xff] %vm628, %v758
          %764 = vst.msk [vmem:[#allocation3 + $0x48] sm:$0xff] %vm628, %v760
          %v765 = vsel %vm628, %v582, 0.0
          %v766 = vrot.slane %v765, 4
          %v767 = vadd.f32 %v765, %v766
          %v768 = vrot.slane %v767, 2
          %v769 = vadd.f32 %v767, %v768
          %v770 = vrot.slane %v769, 1
          %v771 = vadd.f32 %v769, %v770
          %v772 = vsel %vm628, %v590, 0.0
          %v773 = vrot.slane %v772, 4
          %v774 = vadd.f32 %v772, %v773
          %v775 = vrot.slane %v774, 2
          %v776 = vadd.f32 %v774, %v775
          %v777 = vrot.slane %v776, 1
          %v778 = vadd.f32 %v776, %v777
          %v779 = vsel %vm628, %v598, 0.0
          %v780 = vrot.slane %v779, 4
          %v781 = vadd.f32 %v779, %v780
          %v782 = vrot.slane %v781, 2
          %v783 = vadd.f32 %v781, %v782
          %v784 = vrot.slane %v783, 1
          %v785 = vadd.f32 %v783, %v784
          %v786 = vsel %vm628, %v606, 0.0
          %v787 = vrot.slane %v786, 4
          %v788 = vadd.f32 %v786, %v787
          %v789 = vrot.slane %v788, 2
          %v790 = vadd.f32 %v788, %v789
          %v791 = vrot.slane %v790, 1
          %v792 = vadd.f32 %v790, %v791
          %v793 = vmul.f32 %v771, 0.00032552084
          %v794 = vmul.f32 %v778, 0.00032552084
          %v795 = vmul.f32 %v785, 0.00032552084
          %v796 = vmul.f32 %v792, 0.00032552084
          %v797 = vmul.f32 %v793, %v793
          %v798 = vmul.f32 %v794, %v794
          %v799 = vsub.f32 %v795, %v797
          %v800 = vsub.f32 %v796, %v798
          %v801 = vmax.f32 %v799, 0.0
          %v802 = vmax.f32 %v800, 0.0
          %v803 = vadd.f32 %v801, 1e-05
          %v804 = vadd.f32 %v802, 1e-05
          %v805 = vrsqrt.pop %v803
          %v806 = vrsqrt.pop %v804
          %v807 = vmul.f32 %v614, %v805
          %v808 = vmul.f32 %v622, %v806
          %809 = vst.msk [vmem:[#allocation2 + $0x10] sm:$0xff] %vm628, %v807
          %810 = vst.msk [vmem:[#allocation2 + $0x50] sm:$0xff] %vm628, %v808
          %v811 = vmul.f32 %v807, %v793
          %v812 = vmul.f32 %v808, %v794
          %815 = vrot.lane.b32.xlu0 %v811, 1
          %v816 = vpop.permute.xlu0 %815
          %817 = vrot.lane.b32.xlu0 %v812, 1
          %v818 = vpop.permute.xlu0 %817
          %v821 = vsub.f32 %v614, %v816
          %v822 = vsub.f32 %v622, %v818
          %825 = vrot.lane.b32.xlu0 %v821, 127
          %v826 = vpop.permute.xlu0 %825
          %827 = vrot.lane.b32.xlu0 %v822, 127
          %v828 = vpop.permute.xlu0 %827
          %831 = vst.msk [vmem:[#allocation3 + $0x10] sm:$0xff] %vm628, %v826
          %832 = vst.msk [vmem:[#allocation3 + $0x50] sm:$0xff] %vm628, %v828
          %v833 = vsel %vm628, %v583, 0.0
          %v834 = vrot.slane %v833, 4
          %v835 = vadd.f32 %v833, %v834
          %v836 = vrot.slane %v835, 2
          %v837 = vadd.f32 %v835, %v836
          %v838 = vrot.slane %v837, 1
          %v839 = vadd.f32 %v837, %v838
          %v840 = vsel %vm628, %v591, 0.0
          %v841 = vrot.slane %v840, 4
          %v842 = vadd.f32 %v840, %v841
          %v843 = vrot.slane %v842, 2
          %v844 = vadd.f32 %v842, %v843
          %v845 = vrot.slane %v844, 1
          %v846 = vadd.f32 %v844, %v845
          %v847 = vsel %vm628, %v599, 0.0
          %v848 = vrot.slane %v847, 4
          %v849 = vadd.f32 %v847, %v848
          %v850 = vrot.slane %v849, 2
          %v851 = vadd.f32 %v849, %v850
          %v852 = vrot.slane %v851, 1
          %v853 = vadd.f32 %v851, %v852
          %v854 = vsel %vm628, %v607, 0.0
          %v855 = vrot.slane %v854, 4
          %v856 = vadd.f32 %v854, %v855
          %v857 = vrot.slane %v856, 2
          %v858 = vadd.f32 %v856, %v857
          %v859 = vrot.slane %v858, 1
          %v860 = vadd.f32 %v858, %v859
          %v861 = vmul.f32 %v839, 0.00032552084
          %v862 = vmul.f32 %v846, 0.00032552084
          %v863 = vmul.f32 %v853, 0.00032552084
          %v864 = vmul.f32 %v860, 0.00032552084
          %v865 = vmul.f32 %v861, %v861
          %v866 = vmul.f32 %v862, %v862
          %v867 = vsub.f32 %v863, %v865
          %v868 = vsub.f32 %v864, %v866
          %v869 = vmax.f32 %v867, 0.0
          %v870 = vmax.f32 %v868, 0.0
          %v871 = vadd.f32 %v869, 1e-05
          %v872 = vadd.f32 %v870, 1e-05
          %v873 = vrsqrt.pop %v871
          %v874 = vrsqrt.pop %v872
          %v875 = vmul.f32 %v615, %v873
          %v876 = vmul.f32 %v623, %v874
          %877 = vst.msk [vmem:[#allocation2 + $0x18] sm:$0xff] %vm628, %v875
          %878 = vst.msk [vmem:[#allocation2 + $0x58] sm:$0xff] %vm628, %v876
          %v879 = vmul.f32 %v875, %v861
          %v880 = vmul.f32 %v876, %v862
          %883 = vrot.lane.b32.xlu0 %v879, 1
          %v884 = vpop.permute.xlu0 %883
          %885 = vrot.lane.b32.xlu0 %v880, 1
          %v886 = vpop.permute.xlu0 %885
          %v889 = vsub.f32 %v615, %v884
          %v890 = vsub.f32 %v623, %v886
          %893 = vrot.lane.b32.xlu0 %v889, 127
          %v894 = vpop.permute.xlu0 %893
          %895 = vrot.lane.b32.xlu0 %v890, 127
          %v896 = vpop.permute.xlu0 %895
          %899 = vst.msk [vmem:[#allocation3 + $0x18] sm:$0xff] %vm628, %v894
          %900 = vst.msk [vmem:[#allocation3 + $0x58] sm:$0xff] %vm628, %v896
          %v901 = vsel %vm628, %v584, 0.0
          %v902 = vrot.slane %v901, 4
          %v903 = vadd.f32 %v901, %v902
          %v904 = vrot.slane %v903, 2
          %v905 = vadd.f32 %v903, %v904
          %v906 = vrot.slane %v905, 1
          %v907 = vadd.f32 %v905, %v906
          %v908 = vsel %vm628, %v592, 0.0
          %v909 = vrot.slane %v908, 4
          %v910 = vadd.f32 %v908, %v909
          %v911 = vrot.slane %v910, 2
          %v912 = vadd.f32 %v910, %v911
          %v913 = vrot.slane %v912, 1
          %v914 = vadd.f32 %v912, %v913
          %v915 = vsel %vm628, %v600, 0.0
          %v916 = vrot.slane %v915, 4
          %v917 = vadd.f32 %v915, %v916
          %v918 = vrot.slane %v917, 2
          %v919 = vadd.f32 %v917, %v918
          %v920 = vrot.slane %v919, 1
          %v921 = vadd.f32 %v919, %v920
          %v922 = vsel %vm628, %v608, 0.0
          %v923 = vrot.slane %v922, 4
          %v924 = vadd.f32 %v922, %v923
          %v925 = vrot.slane %v924, 2
          %v926 = vadd.f32 %v924, %v925
          %v927 = vrot.slane %v926, 1
          %v928 = vadd.f32 %v926, %v927
          %v929 = vmul.f32 %v907, 0.00032552084
          %v930 = vmul.f32 %v914, 0.00032552084
          %v931 = vmul.f32 %v921, 0.00032552084
          %v932 = vmul.f32 %v928, 0.00032552084
          %v933 = vmul.f32 %v929, %v929
          %v934 = vmul.f32 %v930, %v930
          %v935 = vsub.f32 %v931, %v933
          %v936 = vsub.f32 %v932, %v934
          %v937 = vmax.f32 %v935, 0.0
          %v938 = vmax.f32 %v936, 0.0
          %v939 = vadd.f32 %v937, 1e-05
          %v940 = vadd.f32 %v938, 1e-05
          %v941 = vrsqrt.pop %v939
          %v942 = vrsqrt.pop %v940
          %v943 = vmul.f32 %v616, %v941
          %v944 = vmul.f32 %v624, %v942
          %945 = vst.msk [vmem:[#allocation2 + $0x20] sm:$0xff] %vm628, %v943
          %946 = vst.msk [vmem:[#allocation2 + $0x60] sm:$0xff] %vm628, %v944
          %v947 = vmul.f32 %v943, %v929
          %v948 = vmul.f32 %v944, %v930
          %951 = vrot.lane.b32.xlu0 %v947, 1
          %v952 = vpop.permute.xlu0 %951
          %953 = vrot.lane.b32.xlu0 %v948, 1
          %v954 = vpop.permute.xlu0 %953
          %v957 = vsub.f32 %v616, %v952
          %v958 = vsub.f32 %v624, %v954
          %961 = vrot.lane.b32.xlu0 %v957, 127
          %v962 = vpop.permute.xlu0 %961
          %963 = vrot.lane.b32.xlu0 %v958, 127
          %v964 = vpop.permute.xlu0 %963
          %967 = vst.msk [vmem:[#allocation3 + $0x20] sm:$0xff] %vm628, %v962
          %968 = vst.msk [vmem:[#allocation3 + $0x60] sm:$0xff] %vm628, %v964
          %v969 = vsel %vm628, %v585, 0.0
          %v970 = vrot.slane %v969, 4
          %v971 = vadd.f32 %v969, %v970
          %v972 = vrot.slane %v971, 2
          %v973 = vadd.f32 %v971, %v972
          %v974 = vrot.slane %v973, 1
          %v975 = vadd.f32 %v973, %v974
          %v976 = vsel %vm628, %v593, 0.0
          %v977 = vrot.slane %v976, 4
          %v978 = vadd.f32 %v976, %v977
          %v979 = vrot.slane %v978, 2
          %v980 = vadd.f32 %v978, %v979
          %v981 = vrot.slane %v980, 1
          %v982 = vadd.f32 %v980, %v981
          %v983 = vsel %vm628, %v601, 0.0
          %v984 = vrot.slane %v983, 4
          %v985 = vadd.f32 %v983, %v984
          %v986 = vrot.slane %v985, 2
          %v987 = vadd.f32 %v985, %v986
          %v988 = vrot.slane %v987, 1
          %v989 = vadd.f32 %v987, %v988
          %v990 = vsel %vm628, %v609, 0.0
          %v991 = vrot.slane %v990, 4
          %v992 = vadd.f32 %v990, %v991
          %v993 = vrot.slane %v992, 2
          %v994 = vadd.f32 %v992, %v993
          %v995 = vrot.slane %v994, 1
          %v996 = vadd.f32 %v994, %v995
          %v997 = vmul.f32 %v975, 0.00032552084
          %v998 = vmul.f32 %v982, 0.00032552084
          %v999 = vmul.f32 %v989, 0.00032552084
          %v1000 = vmul.f32 %v996, 0.00032552084
          %v1001 = vmul.f32 %v997, %v997
          %v1002 = vmul.f32 %v998, %v998
          %v1003 = vsub.f32 %v999, %v1001
          %v1004 = vsub.f32 %v1000, %v1002
          %v1005 = vmax.f32 %v1003, 0.0
          %v1006 = vmax.f32 %v1004, 0.0
          %v1007 = vadd.f32 %v1005, 1e-05
          %v1008 = vadd.f32 %v1006, 1e-05
          %v1009 = vrsqrt.pop %v1007
          %v1010 = vrsqrt.pop %v1008
          %v1011 = vmul.f32 %v617, %v1009
          %v1012 = vmul.f32 %v625, %v1010
          %1013 = vst.msk [vmem:[#allocation2 + $0x28] sm:$0xff] %vm628, %v1011
          %1014 = vst.msk [vmem:[#allocation2 + $0x68] sm:$0xff] %vm628, %v1012
          %v1015 = vmul.f32 %v1011, %v997
          %v1016 = vmul.f32 %v1012, %v998
          %1019 = vrot.lane.b32.xlu0 %v1015, 1
          %v1020 = vpop.permute.xlu0 %1019
          %1021 = vrot.lane.b32.xlu0 %v1016, 1
          %v1022 = vpop.permute.xlu0 %1021
          %v1025 = vsub.f32 %v617, %v1020
          %v1026 = vsub.f32 %v625, %v1022
          %1029 = vrot.lane.b32.xlu0 %v1025, 127
          %v1030 = vpop.permute.xlu0 %1029
          %1031 = vrot.lane.b32.xlu0 %v1026, 127
          %v1032 = vpop.permute.xlu0 %1031
          %1035 = vst.msk [vmem:[#allocation3 + $0x28] sm:$0xff] %vm628, %v1030
          %1036 = vst.msk [vmem:[#allocation3 + $0x68] sm:$0xff] %vm628, %v1032
          %v1037 = vsel %vm628, %v586, 0.0
          %v1038 = vrot.slane %v1037, 4
          %v1039 = vadd.f32 %v1037, %v1038
          %v1040 = vrot.slane %v1039, 2
          %v1041 = vadd.f32 %v1039, %v1040
          %v1042 = vrot.slane %v1041, 1
          %v1043 = vadd.f32 %v1041, %v1042
          %v1044 = vsel %vm628, %v594, 0.0
          %v1045 = vrot.slane %v1044, 4
          %v1046 = vadd.f32 %v1044, %v1045
          %v1047 = vrot.slane %v1046, 2
          %v1048 = vadd.f32 %v1046, %v1047
          %v1049 = vrot.slane %v1048, 1
          %v1050 = vadd.f32 %v1048, %v1049
          %v1051 = vsel %vm628, %v602, 0.0
          %v1052 = vrot.slane %v1051, 4
          %v1053 = vadd.f32 %v1051, %v1052
          %v1054 = vrot.slane %v1053, 2
          %v1055 = vadd.f32 %v1053, %v1054
          %v1056 = vrot.slane %v1055, 1
          %v1057 = vadd.f32 %v1055, %v1056
          %v1058 = vsel %vm628, %v610, 0.0
          %v1059 = vrot.slane %v1058, 4
          %v1060 = vadd.f32 %v1058, %v1059
          %v1061 = vrot.slane %v1060, 2
          %v1062 = vadd.f32 %v1060, %v1061
          %v1063 = vrot.slane %v1062, 1
          %v1064 = vadd.f32 %v1062, %v1063
          %v1065 = vmul.f32 %v1043, 0.00032552084
          %v1066 = vmul.f32 %v1050, 0.00032552084
          %v1067 = vmul.f32 %v1057, 0.00032552084
          %v1068 = vmul.f32 %v1064, 0.00032552084
          %v1069 = vmul.f32 %v1065, %v1065
          %v1070 = vmul.f32 %v1066, %v1066
          %v1071 = vsub.f32 %v1067, %v1069
          %v1072 = vsub.f32 %v1068, %v1070
          %v1073 = vmax.f32 %v1071, 0.0
          %v1074 = vmax.f32 %v1072, 0.0
          %v1075 = vadd.f32 %v1073, 1e-05
          %v1076 = vadd.f32 %v1074, 1e-05
          %v1077 = vrsqrt.pop %v1075
          %v1078 = vrsqrt.pop %v1076
          %v1079 = vmul.f32 %v618, %v1077
          %v1080 = vmul.f32 %v626, %v1078
          %1081 = vst.msk [vmem:[#allocation2 + $0x30] sm:$0xff] %vm628, %v1079
          %1082 = vst.msk [vmem:[#allocation2 + $0x70] sm:$0xff] %vm628, %v1080
          %v1083 = vmul.f32 %v1079, %v1065
          %v1084 = vmul.f32 %v1080, %v1066
          %1087 = vrot.lane.b32.xlu0 %v1083, 1
          %v1088 = vpop.permute.xlu0 %1087
          %1089 = vrot.lane.b32.xlu0 %v1084, 1
          %v1090 = vpop.permute.xlu0 %1089
          %v1093 = vsub.f32 %v618, %v1088
          %v1094 = vsub.f32 %v626, %v1090
          %1097 = vrot.lane.b32.xlu0 %v1093, 127
          %v1098 = vpop.permute.xlu0 %1097
          %1099 = vrot.lane.b32.xlu0 %v1094, 127
          %v1100 = vpop.permute.xlu0 %1099
          %1103 = vst.msk [vmem:[#allocation3 + $0x30] sm:$0xff] %vm628, %v1098
          %1104 = vst.msk [vmem:[#allocation3 + $0x70] sm:$0xff] %vm628, %v1100
          %v1105 = vsel %vm628, %v587, 0.0
          %v1106 = vrot.slane %v1105, 4
          %v1107 = vadd.f32 %v1105, %v1106
          %v1108 = vrot.slane %v1107, 2
          %v1109 = vadd.f32 %v1107, %v1108
          %v1110 = vrot.slane %v1109, 1
          %v1111 = vadd.f32 %v1109, %v1110
          %v1112 = vsel %vm628, %v595, 0.0
          %v1113 = vrot.slane %v1112, 4
          %v1114 = vadd.f32 %v1112, %v1113
          %v1115 = vrot.slane %v1114, 2
          %v1116 = vadd.f32 %v1114, %v1115
          %v1117 = vrot.slane %v1116, 1
          %v1118 = vadd.f32 %v1116, %v1117
          %v1119 = vsel %vm628, %v603, 0.0
          %v1120 = vrot.slane %v1119, 4
          %v1121 = vadd.f32 %v1119, %v1120
          %v1122 = vrot.slane %v1121, 2
          %v1123 = vadd.f32 %v1121, %v1122
          %v1124 = vrot.slane %v1123, 1
          %v1125 = vadd.f32 %v1123, %v1124
          %v1126 = vsel %vm628, %v611, 0.0
          %v1127 = vrot.slane %v1126, 4
          %v1128 = vadd.f32 %v1126, %v1127
          %v1129 = vrot.slane %v1128, 2
          %v1130 = vadd.f32 %v1128, %v1129
          %v1131 = vrot.slane %v1130, 1
          %v1132 = vadd.f32 %v1130, %v1131
          %v1133 = vmul.f32 %v1111, 0.00032552084
          %v1134 = vmul.f32 %v1118, 0.00032552084
          %v1135 = vmul.f32 %v1125, 0.00032552084
          %v1136 = vmul.f32 %v1132, 0.00032552084
          %v1137 = vmul.f32 %v1133, %v1133
          %v1138 = vmul.f32 %v1134, %v1134
          %v1139 = vsub.f32 %v1135, %v1137
          %v1140 = vsub.f32 %v1136, %v1138
          %v1141 = vmax.f32 %v1139, 0.0
          %v1142 = vmax.f32 %v1140, 0.0
          %v1143 = vadd.f32 %v1141, 1e-05
          %v1144 = vadd.f32 %v1142, 1e-05
          %v1145 = vrsqrt.pop %v1143
          %v1146 = vrsqrt.pop %v1144
          %v1147 = vmul.f32 %v619, %v1145
          %v1148 = vmul.f32 %v627, %v1146
          %1149 = vst.msk [vmem:[#allocation2 + $0x38] sm:$0xff] %vm628, %v1147
          %1150 = vst.msk [vmem:[#allocation2 + $0x78] sm:$0xff] %vm628, %v1148
          %v1151 = vmul.f32 %v1147, %v1133
          %v1152 = vmul.f32 %v1148, %v1134
          %1155 = vrot.lane.b32.xlu0 %v1151, 1
          %v1156 = vpop.permute.xlu0 %1155
          %1157 = vrot.lane.b32.xlu0 %v1152, 1
          %v1158 = vpop.permute.xlu0 %1157
          %v1161 = vsub.f32 %v619, %v1156
          %v1162 = vsub.f32 %v627, %v1158
          %1165 = vrot.lane.b32.xlu0 %v1161, 127
          %v1166 = vpop.permute.xlu0 %1165
          %1167 = vrot.lane.b32.xlu0 %v1162, 127
          %v1168 = vpop.permute.xlu0 %1167
          %1171 = vst.msk [vmem:[#allocation3 + $0x38] sm:$0xff] %vm628, %v1166
          %1172 = vst.msk [vmem:[#allocation3 + $0x78] sm:$0xff] %vm628, %v1168
        $region78: #{cbatchnorm1d.1} parent=61 // pred_fallthru
          _
        // Predicated region
        $region79: #{cbatchnorm1d.1} parent=61 // pred_check
          %p1173 = pneg %p574
        $region80: #{cbatchnorm1d.1} parent=61 // pred_check_branch
          %1175 = sbr.rel (%p1173) target = $region82
        $region81: #{cbatchnorm1d.1} parent=61 // pred_region
          %v1176 = vld [vmem:[%s278] sm:$0xff]
          %v1177 = vld [vmem:[%s278 + $0x8] sm:$0xff]
          %v1178 = vld [vmem:[%s278 + $0x10] sm:$0xff]
          %v1179 = vld [vmem:[%s278 + $0x18] sm:$0xff]
          %v1180 = vld [vmem:[%s278 + $0x20] sm:$0xff]
          %v1181 = vld [vmem:[%s278 + $0x28] sm:$0xff]
          %v1182 = vld [vmem:[%s278 + $0x30] sm:$0xff]
          %v1183 = vld [vmem:[%s278 + $0x38] sm:$0xff]
          %v1184 = vld [vmem:[%s278 + $0x40] sm:$0xff]
          %v1185 = vld [vmem:[%s278 + $0x48] sm:$0xff]
          %v1186 = vld [vmem:[%s278 + $0x50] sm:$0xff]
          %v1187 = vld [vmem:[%s278 + $0x58] sm:$0xff]
          %v1188 = vld [vmem:[%s278 + $0x60] sm:$0xff]
          %v1189 = vld [vmem:[%s278 + $0x68] sm:$0xff]
          %v1190 = vld [vmem:[%s278 + $0x70] sm:$0xff]
          %v1191 = vld [vmem:[%s278 + $0x78] sm:$0xff]
          %v1192 = vld [vmem:[#allocation2] sm:$0xff]
          %v1193 = vld [vmem:[#allocation2 + $0x8] sm:$0xff]
          %v1194 = vld [vmem:[#allocation2 + $0x10] sm:$0xff]
          %v1195 = vld [vmem:[#allocation2 + $0x18] sm:$0xff]
          %v1196 = vld [vmem:[#allocation2 + $0x20] sm:$0xff]
          %v1197 = vld [vmem:[#allocation2 + $0x28] sm:$0xff]
          %v1198 = vld [vmem:[#allocation2 + $0x30] sm:$0xff]
          %v1199 = vld [vmem:[#allocation2 + $0x38] sm:$0xff]
          %v1200 = vld [vmem:[#allocation2 + $0x40] sm:$0xff]
          %v1201 = vld [vmem:[#allocation2 + $0x48] sm:$0xff]
          %v1202 = vld [vmem:[#allocation2 + $0x50] sm:$0xff]
          %v1203 = vld [vmem:[#allocation2 + $0x58] sm:$0xff]
          %v1204 = vld [vmem:[#allocation2 + $0x60] sm:$0xff]
          %v1205 = vld [vmem:[#allocation2 + $0x68] sm:$0xff]
          %v1206 = vld [vmem:[#allocation2 + $0x70] sm:$0xff]
          %v1207 = vld [vmem:[#allocation2 + $0x78] sm:$0xff]
          %1209 = vset.pattern.permute.xlu0 0
          %1210 = vperm.xlu0 %1209, %v1192
          %v1211 = vpop.permute.xlu0 %1210
          %1214 = vset.pattern.permute.xlu0 0
          %1215 = vperm.xlu0 %1214, %v1193
          %v1216 = vpop.permute.xlu0 %1215
          %1219 = vset.pattern.permute.xlu0 0
          %1220 = vperm.xlu0 %1219, %v1194
          %v1221 = vpop.permute.xlu0 %1220
          %1224 = vset.pattern.permute.xlu0 0
          %1225 = vperm.xlu0 %1224, %v1195
          %v1226 = vpop.permute.xlu0 %1225
          %1229 = vset.pattern.permute.xlu0 0
          %1230 = vperm.xlu0 %1229, %v1196
          %v1231 = vpop.permute.xlu0 %1230
          %1234 = vset.pattern.permute.xlu0 0
          %1235 = vperm.xlu0 %1234, %v1197
          %v1236 = vpop.permute.xlu0 %1235
          %1239 = vset.pattern.permute.xlu0 0
          %1240 = vperm.xlu0 %1239, %v1198
          %v1241 = vpop.permute.xlu0 %1240
          %1244 = vset.pattern.permute.xlu0 0
          %1245 = vperm.xlu0 %1244, %v1199
          %v1246 = vpop.permute.xlu0 %1245
          %1249 = vset.pattern.permute.xlu0 0
          %1250 = vperm.xlu0 %1249, %v1200
          %v1251 = vpop.permute.xlu0 %1250
          %1254 = vset.pattern.permute.xlu0 0
          %1255 = vperm.xlu0 %1254, %v1201
          %v1256 = vpop.permute.xlu0 %1255
          %1259 = vset.pattern.permute.xlu0 0
          %1260 = vperm.xlu0 %1259, %v1202
          %v1261 = vpop.permute.xlu0 %1260
          %1264 = vset.pattern.permute.xlu0 0
          %1265 = vperm.xlu0 %1264, %v1203
          %v1266 = vpop.permute.xlu0 %1265
          %1269 = vset.pattern.permute.xlu0 0
          %1270 = vperm.xlu0 %1269, %v1204
          %v1271 = vpop.permute.xlu0 %1270
          %1274 = vset.pattern.permute.xlu0 0
          %1275 = vperm.xlu0 %1274, %v1205
          %v1276 = vpop.permute.xlu0 %1275
          %1279 = vset.pattern.permute.xlu0 0
          %1280 = vperm.xlu0 %1279, %v1206
          %v1281 = vpop.permute.xlu0 %1280
          %1284 = vset.pattern.permute.xlu0 0
          %1285 = vperm.xlu0 %1284, %v1207
          %v1286 = vpop.permute.xlu0 %1285
          %v1288 = vmul.f32 %v1176, %v1211
          %v1289 = vmul.f32 %v1177, %v1216
          %v1290 = vmul.f32 %v1178, %v1221
          %v1291 = vmul.f32 %v1179, %v1226
          %v1292 = vmul.f32 %v1180, %v1231
          %v1293 = vmul.f32 %v1181, %v1236
          %v1294 = vmul.f32 %v1182, %v1241
          %v1295 = vmul.f32 %v1183, %v1246
          %v1296 = vmul.f32 %v1184, %v1251
          %v1297 = vmul.f32 %v1185, %v1256
          %v1298 = vmul.f32 %v1186, %v1261
          %v1299 = vmul.f32 %v1187, %v1266
          %v1300 = vmul.f32 %v1188, %v1271
          %v1301 = vmul.f32 %v1189, %v1276
          %v1302 = vmul.f32 %v1190, %v1281
          %v1303 = vmul.f32 %v1191, %v1286
          %v1304 = vld [vmem:[#allocation3] sm:$0xff]
          %v1305 = vld [vmem:[#allocation3 + $0x8] sm:$0xff]
          %v1306 = vld [vmem:[#allocation3 + $0x10] sm:$0xff]
          %v1307 = vld [vmem:[#allocation3 + $0x18] sm:$0xff]
          %v1308 = vld [vmem:[#allocation3 + $0x20] sm:$0xff]
          %v1309 = vld [vmem:[#allocation3 + $0x28] sm:$0xff]
          %v1310 = vld [vmem:[#allocation3 + $0x30] sm:$0xff]
          %v1311 = vld [vmem:[#allocation3 + $0x38] sm:$0xff]
          %v1312 = vld [vmem:[#allocation3 + $0x40] sm:$0xff]
          %v1313 = vld [vmem:[#allocation3 + $0x48] sm:$0xff]
          %v1314 = vld [vmem:[#allocation3 + $0x50] sm:$0xff]
          %v1315 = vld [vmem:[#allocation3 + $0x58] sm:$0xff]
          %v1316 = vld [vmem:[#allocation3 + $0x60] sm:$0xff]
          %v1317 = vld [vmem:[#allocation3 + $0x68] sm:$0xff]
          %v1318 = vld [vmem:[#allocation3 + $0x70] sm:$0xff]
          %v1319 = vld [vmem:[#allocation3 + $0x78] sm:$0xff]
          %1321 = vset.pattern.permute.xlu0 0
          %1322 = vperm.xlu0 %1321, %v1304
          %v1323 = vpop.permute.xlu0 %1322
          %1326 = vset.pattern.permute.xlu0 0
          %1327 = vperm.xlu0 %1326, %v1305
          %v1328 = vpop.permute.xlu0 %1327
          %1331 = vset.pattern.permute.xlu0 0
          %1332 = vperm.xlu0 %1331, %v1306
          %v1333 = vpop.permute.xlu0 %1332
          %1336 = vset.pattern.permute.xlu0 0
          %1337 = vperm.xlu0 %1336, %v1307
          %v1338 = vpop.permute.xlu0 %1337
          %1341 = vset.pattern.permute.xlu0 0
          %1342 = vperm.xlu0 %1341, %v1308
          %v1343 = vpop.permute.xlu0 %1342
          %1346 = vset.pattern.permute.xlu0 0
          %1347 = vperm.xlu0 %1346, %v1309
          %v1348 = vpop.permute.xlu0 %1347
          %1351 = vset.pattern.permute.xlu0 0
          %1352 = vperm.xlu0 %1351, %v1310
          %v1353 = vpop.permute.xlu0 %1352
          %1356 = vset.pattern.permute.xlu0 0
          %1357 = vperm.xlu0 %1356, %v1311
          %v1358 = vpop.permute.xlu0 %1357
          %1361 = vset.pattern.permute.xlu0 0
          %1362 = vperm.xlu0 %1361, %v1312
          %v1363 = vpop.permute.xlu0 %1362
          %1366 = vset.pattern.permute.xlu0 0
          %1367 = vperm.xlu0 %1366, %v1313
          %v1368 = vpop.permute.xlu0 %1367
          %1371 = vset.pattern.permute.xlu0 0
          %1372 = vperm.xlu0 %1371, %v1314
          %v1373 = vpop.permute.xlu0 %1372
          %1376 = vset.pattern.permute.xlu0 0
          %1377 = vperm.xlu0 %1376, %v1315
          %v1378 = vpop.permute.xlu0 %1377
          %1381 = vset.pattern.permute.xlu0 0
          %1382 = vperm.xlu0 %1381, %v1316
          %v1383 = vpop.permute.xlu0 %1382
          %1386 = vset.pattern.permute.xlu0 0
          %1387 = vperm.xlu0 %1386, %v1317
          %v1388 = vpop.permute.xlu0 %1387
          %1391 = vset.pattern.permute.xlu0 0
          %1392 = vperm.xlu0 %1391, %v1318
          %v1393 = vpop.permute.xlu0 %1392
          %1396 = vset.pattern.permute.xlu0 0
          %1397 = vperm.xlu0 %1396, %v1319
          %v1398 = vpop.permute.xlu0 %1397
          %v1400 = vadd.f32 %v1288, %v1323
          %v1401 = vadd.f32 %v1289, %v1328
          %v1402 = vadd.f32 %v1290, %v1333
          %v1403 = vadd.f32 %v1291, %v1338
          %v1404 = vadd.f32 %v1292, %v1343
          %v1405 = vadd.f32 %v1293, %v1348
          %v1406 = vadd.f32 %v1294, %v1353
          %v1407 = vadd.f32 %v1295, %v1358
          %v1408 = vadd.f32 %v1296, %v1363
          %v1409 = vadd.f32 %v1297, %v1368
          %v1410 = vadd.f32 %v1298, %v1373
          %v1411 = vadd.f32 %v1299, %v1378
          %v1412 = vadd.f32 %v1300, %v1383
          %v1413 = vadd.f32 %v1301, %v1388
          %v1414 = vadd.f32 %v1302, %v1393
          %v1415 = vadd.f32 %v1303, %v1398
          %1416 = vst [vmem:[%s306] sm:$0xff] %v1400
          %1417 = vst [vmem:[%s306 + $0x8] sm:$0xff] %v1401
          %1418 = vst [vmem:[%s306 + $0x10] sm:$0xff] %v1402
          %1419 = vst [vmem:[%s306 + $0x18] sm:$0xff] %v1403
          %1420 = vst [vmem:[%s306 + $0x20] sm:$0xff] %v1404
          %1421 = vst [vmem:[%s306 + $0x28] sm:$0xff] %v1405
          %1422 = vst [vmem:[%s306 + $0x30] sm:$0xff] %v1406
          %1423 = vst [vmem:[%s306 + $0x38] sm:$0xff] %v1407
          %1424 = vst [vmem:[%s306 + $0x40] sm:$0xff] %v1408
          %1425 = vst [vmem:[%s306 + $0x48] sm:$0xff] %v1409
          %1426 = vst [vmem:[%s306 + $0x50] sm:$0xff] %v1410
          %1427 = vst [vmem:[%s306 + $0x58] sm:$0xff] %v1411
          %1428 = vst [vmem:[%s306 + $0x60] sm:$0xff] %v1412
          %1429 = vst [vmem:[%s306 + $0x68] sm:$0xff] %v1413
          %1430 = vst [vmem:[%s306 + $0x70] sm:$0xff] %v1414
          %1431 = vst [vmem:[%s306 + $0x78] sm:$0xff] %v1415
        $region82: #{cbatchnorm1d.1} parent=61 // pred_fallthru
          _
        %s1432 = sand.u32 %s114, 1
        %s1433 = scalar_lea.sflag [#allocation6], %s1432
        %s1434 = sand.u32 %s114, 1
        %s1435 = smul.addr %s1434, 128
        %s1436 = scalar_lea.vmem [#allocation5], %s1435
        // Predicated region
        $region83: #{cbatchnorm1d.1} parent=61 // pred_check
          %p1437 = pneg %p124
        $region84: #{cbatchnorm1d.1} parent=61 // pred_check_branch
          %1439 = sbr.rel (%p1437) target = $region86
        $region85: #{cbatchnorm1d.1} parent=61 // pred_region
          %s1440 = smul.u32 %s25, %s24
          %s1441 = smul.u32 2, %s22
          %s1442 = smul.u32 8, %s23
          %s1444 = ssub.s32 2048, 2048
          %1445 = vsyncadd %s1433, %s1444
          %s1446 = smul.addr %s1442, 3
          %s1447 = sadd.s32 %s1440, %s1446
          %s1448 = smul.addr %s1441, 24
          %s1449 = sadd.s32 %s1447, %s1448
          %s1450 = smul.addr %s1449, 128
          %s1451 = scalar_lea.hbm %s2, %s1450
          %s1452 = sshll.u32 %s1436, 4
          %s1453 = int_to_ptr.vmem [resolvable:$true] %s1452
          %1458 = dma.vmem_to_hbm [thread:$0]  %s1453, 2048, %s1451, %s1433, 128, 384, 8
        $region86: #{cbatchnorm1d.1} parent=61 // pred_fallthru
          _
      $region62: #{cbatchnorm1d.1} parent=5 // pred_fallthru
        _
      %p1459 = scmp.le.s32.totalorder 2, %s11
      // Predicated region
      $region87: #{cbatchnorm1d.1} parent=5 // pred_check
        %p1460 = pneg %p1459
      $region88: #{cbatchnorm1d.1} parent=5 // pred_check_branch
        %1462 = sbr.rel (%p1460) target = $region90
      $region89: #{cbatchnorm1d.1} parent=5 // pred_region
        %s1463 = ssub.s32 %s11, 2
        // Predicated region
        $region91: #{cbatchnorm1d.1} parent=89 // pred_check
          %p1464 = pneg %p130
        $region92: #{cbatchnorm1d.1} parent=89 // pred_check_branch
          %1466 = sbr.rel (%p1464) target = $region94
        $region93: #{cbatchnorm1d.1} parent=89 // pred_region
          %s1467 = sand.u32 %s115, 1
          %s1468 = scalar_lea.sflag [#allocation6], %s1467
          %s1469 = sand.u32 %s115, 1
          %s1470 = smul.addr %s1469, 128
          %s1471 = scalar_lea.vmem [#allocation5], %s1470
          %1472 = dma.done %s1468, 2048
        $region94: #{cbatchnorm1d.1} parent=89 // pred_fallthru
          _
      $region90: #{cbatchnorm1d.1} parent=5 // pred_fallthru
        _
    $region6: #{cbatchnorm1d.1} parent=1 // loop_footer
      %s15 = sadd.s32 1, %s11
    $region7: #{cbatchnorm1d.1} parent=1 // loop_footer_branch
      %10 = sbr.rel target = $region3
    $region8: #{cbatchnorm1d.1} parent=1 // loop_exit
      _
    %1473 = vsyncpa [#allocation6], 1
    %s1474 = scalar_lea.sflag [#allocation6], 1
    %1475 = vsyncpa %s1474, 1

</llo_original>
